<compile_context>
chip_gen: v6e
topology: v6e:2x2x1
jax: 0.10.0
libtpu: 0.0.40
codegen_flags: <defaults>
</compile_context>

<pallas_src>
import jax
import jax.numpy as jnp
from jax.experimental import pallas as pl
from jax.experimental.pallas import tpu as pltpu

_LANE = 128

# Scoped-VMEM ceiling: sized with headroom against v7x's 64 MiB *physical* VMEM.
# v5e / v6e have 128 MiB physical, so this is conservative there; it intentionally
# exceeds v5e's 16 MiB scoped *default* (that default is not a physical limit).
_VMEM_LIMIT = 40 * 1024 * 1024
# Target working set for the h-resident conv path (double-buffered adj row panel +
# resident h + output tile + weights); keeps well under _VMEM_LIMIT everywhere.
_RESIDENT_BUDGET = 28 * 1024 * 1024


def _round_up(x, m):
    return (x + m - 1) // m * m


def _pad2(a, rows, cols, dtype):
    a = a.astype(dtype)
    if a.shape == (rows, cols):
        return a
    return jnp.zeros((rows, cols), dtype).at[: a.shape[0], : a.shape[1]].set(a)


def _choose_tm(n, target):
    """Row tile: multiple of 128, <= target, and (when possible) small enough that
    the 'parallel' row axis has >= 2 tiles so v7x's two TensorCores both get work."""
    np_lane = _round_up(n, _LANE)
    tm = min(target, np_lane)
    if np_lane >= 2 * _LANE:
        tm = min(tm, _round_up(np_lane // 2, _LANE))
    return max(_LANE, (tm // _LANE) * _LANE)


def _divisor_tile(total, step, target):
    """Largest multiple of `step` that divides `total` and is <= target."""
    t = min(total, max(step, (target // step) * step))
    while total % t:
        t -= step
    return t


# ---------------------------------------------------------------------------
# Kernels
# ---------------------------------------------------------------------------
def emb_kernel(x_ref, w1_ref, b1_ref, w2_ref, b2_ref, s0_ref, t0_ref, h_ref):
    """emb_convs (Linear->ReLU->Linear) -> ReLU -> (dropout=id) -> bns[0]."""
    h = jnp.dot(x_ref[...], w1_ref[...], preferred_element_type=jnp.float32)
    h = jnp.maximum(h + b1_ref[...], 0.0)
    h = jnp.dot(h.astype(jnp.bfloat16), w2_ref[...],
                preferred_element_type=jnp.float32) + b2_ref[...]
    h = jnp.maximum(h, 0.0)                       # F.relu; eval dropout == identity
    h = h * s0_ref[...] + t0_ref[...]             # folded BatchNorm1d (bns[0])
    h_ref[...] = h.astype(h_ref.dtype)


# --- h-resident path (no reduction axis, h is a grid-constant full VMEM block) ----
def conv_resident_kernel(adj_ref, h_ref, wc_ref, bc_ref, out_ref):
    """Intermediate GENsConv: relu(((adj + I) @ h) @ Wc + bc)."""
    agg = jnp.dot(adj_ref[...], h_ref[...], preferred_element_type=jnp.float32)
    h = jnp.dot(agg.astype(jnp.bfloat16), wc_ref[...],
                preferred_element_type=jnp.float32) + bc_ref[...]
    out_ref[...] = jnp.maximum(h, 0.0).astype(out_ref.dtype)


def conv_final_resident_kernel(adj_ref, h_ref, wc_ref, bc_ref, sl_ref, tl_ref,
                               wd_ref, bd_ref, out_ref):
    """Last conv fused with relu, bns[-1] and the decoder Linear."""
    agg = jnp.dot(adj_ref[...], h_ref[...], preferred_element_type=jnp.float32)
    h = jnp.dot(agg.astype(jnp.bfloat16), wc_ref[...],
                preferred_element_type=jnp.float32) + bc_ref[...]
    h = jnp.maximum(h, 0.0)                       # relu; eval dropout == identity
    h = h * sl_ref[...] + tl_ref[...]             # folded BatchNorm1d (bns[-1])
    out = jnp.dot(h.astype(jnp.bfloat16), wd_ref[...],
                  preferred_element_type=jnp.float32) + bd_ref[...]
    out_ref[...] = out.astype(out_ref.dtype)


# --- reduction-grid fallback (large N: adj row panel / h do not fit in VMEM) ------
def conv_reduce_kernel(adj_ref, h_ref, wc_ref, bc_ref, out_ref, acc_ref):
    k = pl.program_id(1)

    @pl.when(k == 0)
    def _():
        acc_ref[...] = jnp.zeros_like(acc_ref)

    acc_ref[...] += jnp.dot(adj_ref[...], h_ref[...],
                            preferred_element_type=jnp.float32)

    @pl.when(k == pl.num_programs(1) - 1)
    def _():
        h = jnp.dot(acc_ref[...].astype(jnp.bfloat16), wc_ref[...],
                    preferred_element_type=jnp.float32) + bc_ref[...]
        out_ref[...] = jnp.maximum(h, 0.0).astype(out_ref.dtype)


def conv_final_reduce_kernel(adj_ref, h_ref, wc_ref, bc_ref, sl_ref, tl_ref,
                             wd_ref, bd_ref, out_ref, acc_ref):
    k = pl.program_id(1)

    @pl.when(k == 0)
    def _():
        acc_ref[...] = jnp.zeros_like(acc_ref)

    acc_ref[...] += jnp.dot(adj_ref[...], h_ref[...],
                            preferred_element_type=jnp.float32)

    @pl.when(k == pl.num_programs(1) - 1)
    def _():
        h = jnp.dot(acc_ref[...].astype(jnp.bfloat16), wc_ref[...],
                    preferred_element_type=jnp.float32) + bc_ref[...]
        h = jnp.maximum(h, 0.0)
        h = h * sl_ref[...] + tl_ref[...]
        out = jnp.dot(h.astype(jnp.bfloat16), wd_ref[...],
                      preferred_element_type=jnp.float32) + bd_ref[...]
        out_ref[...] = out.astype(out_ref.dtype)


# ---------------------------------------------------------------------------
# Wrapper
# ---------------------------------------------------------------------------
def gnn_forward(x, adj_t, params, *, tm_target=512, tk_target=2048,
                emb_tile_target=2048, force_reduction_path=False):
    n, c_in = x.shape
    hidden = params["w1"].shape[1]
    out_c = params["wd"].shape[1]
    num_conv = params["wc"].shape[0]              # == num_layers - 1 (convs[:-1])
    assert num_conv >= 1, "num_layers >= 2 required"  # TODO(synk): num_layers==1 path

    cin_p = _round_up(c_in, _LANE)
    hp = _round_up(hidden, _LANE)
    cout_p = _round_up(out_c, _LANE)
    f32, bf16 = jnp.float32, jnp.bfloat16

    tm = _choose_tm(n, tm_target)
    np_res = _round_up(n, tm)

    # Working-set estimate for the h-resident path.
    resident_bytes = (2 * tm * np_res * 2            # adj row panel, bf16, 2 buffers
                      + 2 * np_res * hp * 2          # resident h (conservatively 2x)
                      + 2 * tm * max(hp, cout_p) * 4 # output tile
                      + 4 * hp * hp * 2 + 2 * hp * cout_p * 2)  # weights
    use_resident = (not force_reduction_path) and resident_bytes <= _RESIDENT_BUDGET

    if use_resident:
        np_ = np_res
        tk = np_
    else:
        tk = max(tm, (tk_target // tm) * tm)      # tm | tk, so one padding serves both
        np_ = _round_up(n, tk)

    # --- pad & cast once outside the kernels.  GEN root/skip term folded with an
    #     O(N) diagonal add (adj@h + h == (adj + I)@h) -- no jnp.eye materialization.
    idx = jnp.arange(n)
    adj_skip = adj_t.at[idx, idx].add(jnp.asarray(1.0, adj_t.dtype))
    adj_p = _pad2(adj_skip, np_, np_, bf16)
    x_p = _pad2(x, np_, cin_p, bf16)

    w1 = _pad2(params["w1"], cin_p, hp, bf16)
    b1 = _pad2(params["b1"], 1, hp, f32)
    w2 = _pad2(params["w2"], hp, hp, bf16)
    b2 = _pad2(params["b2"], 1, hp, f32)
    s0 = _pad2(params["bn0_scale"], 1, hp, f32)
    t0 = _pad2(params["bn0_shift"], 1, hp, f32)
    sl = _pad2(params["bnl_scale"], 1, hp, f32)
    tl = _pad2(params["bnl_shift"], 1, hp, f32)
    wd = _pad2(params["wd"], hp, cout_p, bf16)
    bd = _pad2(params["bd"], 1, cout_p, f32)
    wcs = [_pad2(params["wc"][i], hp, hp, bf16) for i in range(num_conv)]
    bcs = [_pad2(params["bc"][i], 1, hp, f32) for i in range(num_conv)]

    # --- stage 1: emb MLP + ReLU + BN0 (large row tiles; tiny working set) ---------
    tm_emb = _divisor_tile(np_, tm, emb_tile_target)
    full2 = lambda shape: pl.BlockSpec(shape, lambda i: (0, 0))
    h = pl.pallas_call(
        emb_kernel,
        out_shape=jax.ShapeDtypeStruct((np_, hp), bf16),
        grid=(np_ // tm_emb,),
        in_specs=[pl.BlockSpec((tm_emb, cin_p), lambda i: (i, 0)),
                  full2((cin_p, hp)), full2((1, hp)),
                  full2((hp, hp)), full2((1, hp)),
                  full2((1, hp)), full2((1, hp))],
        out_specs=pl.BlockSpec((tm_emb, hp), lambda i: (i, 0)),
        compiler_params=pltpu.CompilerParams(
            dimension_semantics=("parallel",),
            vmem_limit_bytes=_VMEM_LIMIT),
    )(x_p, w1, b1, w2, b2, s0, t0)

    flops_agg = 2 * np_ * np_ * hp + 2 * np_ * hp * hp
    flops_dec = 2 * np_ * hp * cout_p

    if use_resident:
        # --- stage 2/3: h-resident conv layers (row tiles only, "parallel") --------
        conv_params = pltpu.CompilerParams(
            dimension_semantics=("parallel",),
            vmem_limit_bytes=_VMEM_LIMIT)
        grid = (np_ // tm,)
        adj_spec = pl.BlockSpec((tm, np_), lambda i: (i, 0))
        h_spec = pl.BlockSpec((np_, hp), lambda i: (0, 0))       # grid-constant
        w_spec = pl.BlockSpec((hp, hp), lambda i: (0, 0))
        row_spec = pl.BlockSpec((1, hp), lambda i: (0, 0))
        out_h_spec = pl.BlockSpec((tm, hp), lambda i: (i, 0))

        cost_mid = pl.CostEstimate(
            flops=flops_agg, transcendentals=0,
            bytes_accessed=(np_ * np_ * 2 + np_ * hp * 2      # adj + h (read once)
                            + np_ * hp * 2 + hp * hp * 2))    # out + Wc

        for i in range(num_conv - 1):
            h = pl.pallas_call(
                conv_resident_kernel,
                out_shape=jax.ShapeDtypeStruct((np_, hp), bf16),
                grid=grid,
                in_specs=[adj_spec, h_spec, w_spec, row_spec],
                out_specs=out_h_spec,
                compiler_params=conv_params,
                cost_estimate=cost_mid,
            )(adj_p, h, wcs[i], bcs[i])

        cost_last = pl.CostEstimate(
            flops=flops_agg + flops_dec, transcendentals=0,
            bytes_accessed=(np_ * np_ * 2 + np_ * hp * 2 + np_ * cout_p * 4
                            + hp * hp * 2 + hp * cout_p * 2))

        out = pl.pallas_call(
            conv_final_resident_kernel,
            out_shape=jax.ShapeDtypeStruct((np_, cout_p), f32),
            grid=grid,
            in_specs=[adj_spec, h_spec, w_spec, row_spec,
                      row_spec, row_spec,
                      pl.BlockSpec((hp, cout_p), lambda i: (0, 0)),
                      pl.BlockSpec((1, cout_p), lambda i: (0, 0))],
            out_specs=pl.BlockSpec((tm, cout_p), lambda i: (i, 0)),
            compiler_params=conv_params,
            cost_estimate=cost_last,
        )(adj_p, h, wcs[-1], bcs[-1], sl, tl, wd, bd)
    else:
        # --- fallback: (row tiles "parallel") x (adj reduction tiles "arbitrary") --
        conv_params = pltpu.CompilerParams(
            dimension_semantics=("parallel", "arbitrary"),
            vmem_limit_bytes=_VMEM_LIMIT)
        grid = (np_ // tm, np_ // tk)
        adj_spec = pl.BlockSpec((tm, tk), lambda i, k: (i, k))
        h_spec = pl.BlockSpec((tk, hp), lambda i, k: (k, 0))
        w_spec = pl.BlockSpec((hp, hp), lambda i, k: (0, 0))
        row_spec = pl.BlockSpec((1, hp), lambda i, k: (0, 0))
        out_h_spec = pl.BlockSpec((tm, hp), lambda i, k: (i, 0))
        scratch = [pltpu.VMEM((tm, hp), jnp.float32)]
        reread = np_ // tm

        cost_mid = pl.CostEstimate(
            flops=flops_agg, transcendentals=0,
            bytes_accessed=(np_ * np_ * 2 + reread * np_ * hp * 2
                            + np_ * hp * 2 + hp * hp * 2))

        for i in range(num_conv - 1):
            h = pl.pallas_call(
                conv_reduce_kernel,
                out_shape=jax.ShapeDtypeStruct((np_, hp), bf16),
                grid=grid,
                in_specs=[adj_spec, h_spec, w_spec, row_spec],
                out_specs=out_h_spec,
                scratch_shapes=scratch,
                compiler_params=conv_params,
                cost_estimate=cost_mid,
            )(adj_p, h, wcs[i], bcs[i])

        cost_last = pl.CostEstimate(
            flops=flops_agg + flops_dec, transcendentals=0,
            bytes_accessed=(np_ * np_ * 2 + reread * np_ * hp * 2
                            + np_ * cout_p * 4 + hp * hp * 2 + hp * cout_p * 2))

        out = pl.pallas_call(
            conv_final_reduce_kernel,
            out_shape=jax.ShapeDtypeStruct((np_, cout_p), f32),
            grid=grid,
            in_specs=[adj_spec, h_spec, w_spec, row_spec,
                      row_spec, row_spec,
                      pl.BlockSpec((hp, cout_p), lambda i, k: (0, 0)),
                      pl.BlockSpec((1, cout_p), lambda i, k: (0, 0))],
            out_specs=pl.BlockSpec((tm, cout_p), lambda i, k: (i, 0)),
            scratch_shapes=scratch,
            compiler_params=conv_params,
            cost_estimate=cost_last,
        )(adj_p, h, wcs[-1], bcs[-1], sl, tl, wd, bd)

    return out[:n, :out_c]


# ---------------------------------------------------------------------------
# Parameter init (PyTorch-like)
# ---------------------------------------------------------------------------
def init_params(key, in_channels, hidden, out_channels, num_layers):
    ks = jax.random.split(key, 6)

    def linear(k, fan_in, fan_out):
        bound = 1.0 / float(fan_in) ** 0.5
        kw, kb = jax.random.split(k)
        w = jax.random.uniform(kw, (fan_in, fan_out), jnp.float32, -bound, bound)
        b = jax.random.uniform(kb, (1, fan_out), jnp.float32, -bound, bound)
        return w, b

    w1, b1 = linear(ks[0], in_channels, hidden)
    w2, b2 = linear(ks[1], hidden, hidden)

    nconv = num_layers - 1              # forward uses convs[:-1]
    wc_list, bc_list = [], []
    for i in range(nconv):
        w, b = linear(jax.random.fold_in(ks[2], i), hidden, hidden)
        wc_list.append(w)
        bc_list.append(b)
    wc = jnp.stack(wc_list)             # (nconv, H, H)
    bc = jnp.stack(bc_list)             # (nconv, 1, H)

    wd, bd = linear(ks[3], hidden, out_channels)

    eps = 1e-5

    def bn_fold(k):
        kg, kb2, km, kv = jax.random.split(k, 4)
        gamma = 1.0 + 0.1 * jax.random.normal(kg, (1, hidden), jnp.float32)
        beta = 0.1 * jax.random.normal(kb2, (1, hidden), jnp.float32)
        rmean = 0.1 * jax.random.normal(km, (1, hidden), jnp.float32)
        rvar = 1.0 + 0.1 * jax.random.uniform(kv, (1, hidden), jnp.float32)
        scale = gamma / jnp.sqrt(rvar + eps)
        shift = beta - rmean * scale
        return scale, shift

    bn0_scale, bn0_shift = bn_fold(ks[4])
    bnl_scale, bnl_shift = bn_fold(ks[5])

    return dict(w1=w1, b1=b1, w2=w2, b2=b2,
                bn0_scale=bn0_scale, bn0_shift=bn0_shift,
                wc=wc, bc=bc,
                bnl_scale=bnl_scale, bnl_shift=bnl_shift,
                wd=wd, bd=bd)


if __name__ == "__main__":
    key = jax.random.PRNGKey(0)
    N, C_IN, HIDDEN, C_OUT, NUM_LAYERS = 1024, 16, 64, 8, 3
    kx, ka, kp = jax.random.split(key, 3)

    x = jax.random.normal(kx, (N, C_IN), jnp.float32)

    # dense symmetric adjacency with self-loops, row-normalized (adj_t proxy)
    a = (jax.random.uniform(ka, (N, N)) < 0.05).astype(jnp.float32)
    adj_t = a + a.T + jnp.eye(N, dtype=jnp.float32)
    adj_t = adj_t / jnp.maximum(adj_t.sum(axis=1, keepdims=True), 1.0)

    params = init_params(kp, C_IN, HIDDEN, C_OUT, NUM_LAYERS)

    out = gnn_forward(x, adj_t, params)                       # h-resident path
    out_red = gnn_forward(x, adj_t, params,                   # reduction-grid path
                          force_reduction_path=True)
    jax.block_until_ready((out, out_red))
    assert out.shape == (N, C_OUT)
    assert out_red.shape == (N, C_OUT)
    assert jnp.allclose(out, out_red, rtol=2e-2, atol=2e-2)
    print("KERNEL_OK")
</pallas_src>

<mosaic_0001>
module attributes {stable_mosaic.version = 11 : i64} {
  func.func @emb_kernel(%arg0: i32, %arg1: memref<1024x128xbf16, #tpu.memory_space<vmem>>, %arg2: memref<128x128xbf16, #tpu.memory_space<vmem>>, %arg3: memref<1x128xf32, #tpu.memory_space<vmem>>, %arg4: memref<128x128xbf16, #tpu.memory_space<vmem>>, %arg5: memref<1x128xf32, #tpu.memory_space<vmem>>, %arg6: memref<1x128xf32, #tpu.memory_space<vmem>>, %arg7: memref<1x128xf32, #tpu.memory_space<vmem>>, %arg8: memref<1024x128xbf16, #tpu.memory_space<vmem>>) attributes {dimension_semantics = [#tpu.dimension_semantics<parallel>], iteration_bounds = array<i64: 1>, scalar_prefetch = 0 : i64, scratch_operands = 0 : i64, tpu.core_type = #tpu.core_type<tc>, window_params = [{transform_indices = @transform_0, window_bounds = array<i64: 1024, 128>}, {pipeline_mode = #tpu.pipeline_mode<synchronous>, transform_indices = @transform_1, window_bounds = array<i64: 128, 128>}, {pipeline_mode = #tpu.pipeline_mode<synchronous>, transform_indices = @transform_2, window_bounds = array<i64: 1, 128>}, {pipeline_mode = #tpu.pipeline_mode<synchronous>, transform_indices = @transform_3, window_bounds = array<i64: 128, 128>}, {pipeline_mode = #tpu.pipeline_mode<synchronous>, transform_indices = @transform_4, window_bounds = array<i64: 1, 128>}, {pipeline_mode = #tpu.pipeline_mode<synchronous>, transform_indices = @transform_5, window_bounds = array<i64: 1, 128>}, {pipeline_mode = #tpu.pipeline_mode<synchronous>, transform_indices = @transform_6, window_bounds = array<i64: 1, 128>}, {transform_indices = @transform_7, window_bounds = array<i64: 1024, 128>}]} {
    %c0 = arith.constant 0 : index
    %c0_0 = arith.constant 0 : index
    %0 = vector.load %arg1[%c0, %c0_0] : memref<1024x128xbf16, #tpu.memory_space<vmem>>, vector<1024x128xbf16>
    %c0_1 = arith.constant 0 : index
    %c0_2 = arith.constant 0 : index
    %1 = vector.load %arg2[%c0_1, %c0_2] : memref<128x128xbf16, #tpu.memory_space<vmem>>, vector<128x128xbf16>
    %cst = arith.constant dense<0.000000e+00> : vector<1024x128xf32>
    %2 = tpu.matmul %0, %1, %cst {dimension_numbers = #tpu.dot_dimension_numbers<[1], [0], [0], [1], [0, 0, 1, 1], [], []>} : vector<1024x128xbf16>, vector<128x128xbf16>, vector<1024x128xf32> -> vector<1024x128xf32>
    %c0_3 = arith.constant 0 : index
    %c0_4 = arith.constant 0 : index
    %3 = vector.load %arg3[%c0_3, %c0_4] : memref<1x128xf32, #tpu.memory_space<vmem>>, vector<1x128xf32>
    %4 = vector.broadcast %3 : vector<1x128xf32> to vector<1024x128xf32>
    %5 = arith.addf %2, %4 : vector<1024x128xf32>
    %cst_5 = arith.constant 0.000000e+00 : f32
    %6 = vector.broadcast %cst_5 : f32 to vector<1024x128xf32>
    %7 = arith.maximumf %5, %6 : vector<1024x128xf32>
    %8 = arith.truncf %7 : vector<1024x128xf32> to vector<1024x128xbf16>
    %c0_6 = arith.constant 0 : index
    %c0_7 = arith.constant 0 : index
    %9 = vector.load %arg4[%c0_6, %c0_7] : memref<128x128xbf16, #tpu.memory_space<vmem>>, vector<128x128xbf16>
    %cst_8 = arith.constant dense<0.000000e+00> : vector<1024x128xf32>
    %10 = tpu.matmul %8, %9, %cst_8 {dimension_numbers = #tpu.dot_dimension_numbers<[1], [0], [0], [1], [0, 0, 1, 1], [], []>} : vector<1024x128xbf16>, vector<128x128xbf16>, vector<1024x128xf32> -> vector<1024x128xf32>
    %c0_9 = arith.constant 0 : index
    %c0_10 = arith.constant 0 : index
    %11 = vector.load %arg5[%c0_9, %c0_10] : memref<1x128xf32, #tpu.memory_space<vmem>>, vector<1x128xf32>
    %12 = vector.broadcast %11 : vector<1x128xf32> to vector<1024x128xf32>
    %13 = arith.addf %10, %12 : vector<1024x128xf32>
    %cst_11 = arith.constant 0.000000e+00 : f32
    %14 = vector.broadcast %cst_11 : f32 to vector<1024x128xf32>
    %15 = arith.maximumf %13, %14 : vector<1024x128xf32>
    %c0_12 = arith.constant 0 : index
    %c0_13 = arith.constant 0 : index
    %16 = vector.load %arg6[%c0_12, %c0_13] : memref<1x128xf32, #tpu.memory_space<vmem>>, vector<1x128xf32>
    %17 = vector.broadcast %16 : vector<1x128xf32> to vector<1024x128xf32>
    %18 = arith.mulf %15, %17 : vector<1024x128xf32>
    %c0_14 = arith.constant 0 : index
    %c0_15 = arith.constant 0 : index
    %19 = vector.load %arg7[%c0_14, %c0_15] : memref<1x128xf32, #tpu.memory_space<vmem>>, vector<1x128xf32>
    %20 = vector.broadcast %19 : vector<1x128xf32> to vector<1024x128xf32>
    %21 = arith.addf %18, %20 : vector<1024x128xf32>
    %22 = arith.truncf %21 : vector<1024x128xf32> to vector<1024x128xbf16>
    %c0_16 = arith.constant 0 : index
    %c0_17 = arith.constant 0 : index
    %23 = vector.load %arg8[%c0_16, %c0_17] : memref<1024x128xbf16, #tpu.memory_space<vmem>>, vector<1024x128xbf16>
    tpu.vector_store %arg8[%c0_16, %c0_17], %22 {strides = array<i32>} : memref<1024x128xbf16, #tpu.memory_space<vmem>>, vector<1024x128xbf16>,
    return
  }
  func.func @transform_0(%arg0: i32) -> (i32, i32) {
    %c0_i32 = arith.constant 0 : i32
    %c0_i32_0 = arith.constant 0 : i32
    return %arg0, %c0_i32 : i32, i32
  }
  func.func @transform_1(%arg0: i32) -> (i32, i32) {
    %c0_i32 = arith.constant 0 : i32
    %c0_i32_0 = arith.constant 0 : i32
    %c0_i32_1 = arith.constant 0 : i32
    return %c0_i32, %c0_i32_0 : i32, i32
  }
  func.func @transform_2(%arg0: i32) -> (i32, i32) {
    %c0_i32 = arith.constant 0 : i32
    %c0_i32_0 = arith.constant 0 : i32
    %c0_i32_1 = arith.constant 0 : i32
    return %c0_i32, %c0_i32_0 : i32, i32
  }
  func.func @transform_3(%arg0: i32) -> (i32, i32) {
    %c0_i32 = arith.constant 0 : i32
    %c0_i32_0 = arith.constant 0 : i32
    %c0_i32_1 = arith.constant 0 : i32
    return %c0_i32, %c0_i32_0 : i32, i32
  }
  func.func @transform_4(%arg0: i32) -> (i32, i32) {
    %c0_i32 = arith.constant 0 : i32
    %c0_i32_0 = arith.constant 0 : i32
    %c0_i32_1 = arith.constant 0 : i32
    return %c0_i32, %c0_i32_0 : i32, i32
  }
  func.func @transform_5(%arg0: i32) -> (i32, i32) {
    %c0_i32 = arith.constant 0 : i32
    %c0_i32_0 = arith.constant 0 : i32
    %c0_i32_1 = arith.constant 0 : i32
    return %c0_i32, %c0_i32_0 : i32, i32
  }
  func.func @transform_6(%arg0: i32) -> (i32, i32) {
    %c0_i32 = arith.constant 0 : i32
    %c0_i32_0 = arith.constant 0 : i32
    %c0_i32_1 = arith.constant 0 : i32
    return %c0_i32, %c0_i32_0 : i32, i32
  }
  func.func @transform_7(%arg0: i32) -> (i32, i32) {
    %c0_i32 = arith.constant 0 : i32
    %c0_i32_0 = arith.constant 0 : i32
    return %arg0, %c0_i32 : i32, i32
  }
}

</mosaic_0001>

<llo_original>
// kernel: tpu_custom_call.1
$region0: #{tpu_custom_call.1}
  #allocation0 [shape = 'u32[]', space=smem, size = 0x4, offset = 0x4, fixed_abs, tag = 'smem constant byte address 0x4 - core index']
  #allocation1 [shape = 'u32[144,128]{1,0:T(1,128)}', space=vmem, size = 0x12000, scoped, tag = 'internal scratch']
  %s0 = inlined_call_operand.hbm [shape: bf16[1024,128], index: 0, kind: input, shape index: {}]
  %s1 = inlined_call_operand.hbm [shape: bf16[128,128], index: 1, kind: input, shape index: {}]
  %s2 = inlined_call_operand.vmem [shape: f32[1,128], index: 2, kind: input, shape index: {}]
  %s3 = inlined_call_operand.hbm [shape: bf16[128,128], index: 3, kind: input, shape index: {}]
  %s4 = inlined_call_operand.vmem [shape: f32[1,128], index: 4, kind: input, shape index: {}]
  %s5 = inlined_call_operand.vmem [shape: f32[1,128], index: 5, kind: input, shape index: {}]
  %s6 = inlined_call_operand.vmem [shape: f32[1,128], index: 6, kind: input, shape index: {}]
  %s7 = inlined_call_operand.hbm [shape: bf16[1024,128], index: 7, kind: output, shape index: {}]
  %s8 = sld [smem:[#allocation0]]
  $region50: #{tpu_custom_call.1} parent=0
    _
  %s10 = ssub.s32 1, %s8
  %s11 = scalar_select 0, %s10, %s8
  $region1: #{tpu_custom_call.1} parent=0
    #allocation2 [shape = 'u8[262144]{0}', space=vmem, size = 0x40000, scoped, tag = 'input window, operand 0, single buffered']
    #allocation3 [shape = 's32[1]{0}', space=sflag, size = 0x4, scoped, tag = 'scoped memory for tpu_custom_call.1']
    #allocation4 [shape = 's32[1]{0}', space=sflag, size = 0x4, scoped, tag = 'scoped memory for tpu_custom_call.1']
    #allocation5 [shape = 'u8[32768]{0}', space=vmem, size = 0x8000, scoped, tag = 'input window, operand 1, single buffered']
    #allocation6 [shape = 's32[1]{0}', space=sflag, size = 0x4, scoped, tag = 'scoped memory for tpu_custom_call.1']
    #allocation7 [shape = 'u8[32768]{0}', space=vmem, size = 0x8000, scoped, tag = 'input window, operand 3, single buffered']
    #allocation8 [shape = 'u8[262144]{0}', space=vmem, size = 0x40000, scoped, tag = 'output window, operand 0, single buffered']
    %12 = vsyncpa [#allocation3], 0
    %13 = vsyncpa [#allocation6], 0
    %14 = vsyncpa [#allocation4], 0
    // Predicated region
    $region2: #{tpu_custom_call.1} parent=1 // pred_check
      _
    $region3: #{tpu_custom_call.1} parent=1 // pred_check_branch
      %16 = sbr.rel (0) target = $region5
    $region4: #{tpu_custom_call.1} parent=1 // pred_region
      %s18 = ssub.s32 8192, 8192
      %19 = vsyncadd [#allocation3], %s18
      %s20 = sshll.u32 [#allocation2], 4
      %s21 = int_to_ptr.vmem [resolvable:$true] %s20
      %26 = dma.hbm_to_vmem [thread:$0]  %s0, 8192, %s21, [#allocation3], 64, 64, 4
    $region5: #{tpu_custom_call.1} parent=1 // pred_fallthru
      _
    // Predicated region
    $region6: #{tpu_custom_call.1} parent=1 // pred_check
      _
    $region7: #{tpu_custom_call.1} parent=1 // pred_check_branch
      %28 = sbr.rel (0) target = $region9
    $region8: #{tpu_custom_call.1} parent=1 // pred_region
      %s30 = ssub.s32 1024, 1024
      %31 = vsyncadd [#allocation6], %s30
      %s32 = sshll.u32 [#allocation5], 4
      %s33 = int_to_ptr.vmem [resolvable:$true] %s32
      %38 = dma.hbm_to_vmem [thread:$0]  %s1, 1024, %s33, [#allocation6], 64, 64, 4
    $region9: #{tpu_custom_call.1} parent=1 // pred_fallthru
      _
    // Predicated region
    $region10: #{tpu_custom_call.1} parent=1 // pred_check
      _
    $region11: #{tpu_custom_call.1} parent=1 // pred_check_branch
      %40 = sbr.rel (0) target = $region13
    $region12: #{tpu_custom_call.1} parent=1 // pred_region
      _
    $region13: #{tpu_custom_call.1} parent=1 // pred_fallthru
      _
    // Predicated region
    $region14: #{tpu_custom_call.1} parent=1 // pred_check
      _
    $region15: #{tpu_custom_call.1} parent=1 // pred_check_branch
      %42 = sbr.rel (0) target = $region17
    $region16: #{tpu_custom_call.1} parent=1 // pred_region
      %s44 = ssub.s32 1024, 1024
      %45 = vsyncadd [#allocation6], %s44
      %s46 = sshll.u32 [#allocation7], 4
      %s47 = int_to_ptr.vmem [resolvable:$true] %s46
      %52 = dma.hbm_to_vmem [thread:$0]  %s3, 1024, %s47, [#allocation6], 64, 64, 4
    $region17: #{tpu_custom_call.1} parent=1 // pred_fallthru
      _
    // Predicated region
    $region18: #{tpu_custom_call.1} parent=1 // pred_check
      _
    $region19: #{tpu_custom_call.1} parent=1 // pred_check_branch
      %54 = sbr.rel (0) target = $region21
    $region20: #{tpu_custom_call.1} parent=1 // pred_region
      _
    $region21: #{tpu_custom_call.1} parent=1 // pred_fallthru
      _
    // Predicated region
    $region22: #{tpu_custom_call.1} parent=1 // pred_check
      _
    $region23: #{tpu_custom_call.1} parent=1 // pred_check_branch
      %56 = sbr.rel (0) target = $region25
    $region24: #{tpu_custom_call.1} parent=1 // pred_region
      _
    $region25: #{tpu_custom_call.1} parent=1 // pred_fallthru
      _
    // Predicated region
    $region26: #{tpu_custom_call.1} parent=1 // pred_check
      _
    $region27: #{tpu_custom_call.1} parent=1 // pred_check_branch
      %58 = sbr.rel (0) target = $region29
    $region28: #{tpu_custom_call.1} parent=1 // pred_region
      _
    $region29: #{tpu_custom_call.1} parent=1 // pred_fallthru
      _
    // Predicated region
    $region30: #{tpu_custom_call.1} parent=1 // pred_check
      _
    $region31: #{tpu_custom_call.1} parent=1 // pred_check_branch
      %60 = sbr.rel (0) target = $region33
    $region32: #{tpu_custom_call.1} parent=1 // pred_region
      %61 = dma.done [#allocation3], 8192
    $region33: #{tpu_custom_call.1} parent=1 // pred_fallthru
      _
    // Predicated region
    $region34: #{tpu_custom_call.1} parent=1 // pred_check
      _
    $region35: #{tpu_custom_call.1} parent=1 // pred_check_branch
      %63 = sbr.rel (0) target = $region37
    $region36: #{tpu_custom_call.1} parent=1 // pred_region
      %64 = dma.done [#allocation6], 1024
    $region37: #{tpu_custom_call.1} parent=1 // pred_fallthru
      _
    // Predicated region
    $region38: #{tpu_custom_call.1} parent=1 // pred_check
      _
    $region39: #{tpu_custom_call.1} parent=1 // pred_check_branch
      %66 = sbr.rel (0) target = $region41
    $region40: #{tpu_custom_call.1} parent=1 // pred_region
      %67 = dma.done [#allocation6], 1024
    $region41: #{tpu_custom_call.1} parent=1 // pred_fallthru
      _
    %v69 = vld [vmem:[#allocation2] sm:$0xf]
    %v70 = vld [vmem:[#allocation2 + $0x4] sm:$0xf]
    %v71 = vld [vmem:[#allocation2 + $0x8] sm:$0xf]
    %v72 = vld [vmem:[#allocation2 + $0xc] sm:$0xf]
    %v73 = vld [vmem:[#allocation2 + $0x10] sm:$0xf]
    %v74 = vld [vmem:[#allocation2 + $0x14] sm:$0xf]
    %v75 = vld [vmem:[#allocation2 + $0x18] sm:$0xf]
    %v76 = vld [vmem:[#allocation2 + $0x1c] sm:$0xf]
    %v77 = vld [vmem:[#allocation2 + $0x20] sm:$0xf]
    %v78 = vld [vmem:[#allocation2 + $0x24] sm:$0xf]
    %v79 = vld [vmem:[#allocation2 + $0x28] sm:$0xf]
    %v80 = vld [vmem:[#allocation2 + $0x2c] sm:$0xf]
    %v81 = vld [vmem:[#allocation2 + $0x30] sm:$0xf]
    %v82 = vld [vmem:[#allocation2 + $0x34] sm:$0xf]
    %v83 = vld [vmem:[#allocation2 + $0x38] sm:$0xf]
    %v84 = vld [vmem:[#allocation2 + $0x3c] sm:$0xf]
    %v85 = vld [vmem:[#allocation2 + $0x40] sm:$0xf]
    %v86 = vld [vmem:[#allocation2 + $0x44] sm:$0xf]
    %v87 = vld [vmem:[#allocation2 + $0x48] sm:$0xf]
    %v88 = vld [vmem:[#allocation2 + $0x4c] sm:$0xf]
    %v89 = vld [vmem:[#allocation2 + $0x50] sm:$0xf]
    %v90 = vld [vmem:[#allocation2 + $0x54] sm:$0xf]
    %v91 = vld [vmem:[#allocation2 + $0x58] sm:$0xf]
    %v92 = vld [vmem:[#allocation2 + $0x5c] sm:$0xf]
    %v93 = vld [vmem:[#allocation2 + $0x60] sm:$0xf]
    %v94 = vld [vmem:[#allocation2 + $0x64] sm:$0xf]
    %v95 = vld [vmem:[#allocation2 + $0x68] sm:$0xf]
    %v96 = vld [vmem:[#allocation2 + $0x6c] sm:$0xf]
    %v97 = vld [vmem:[#allocation2 + $0x70] sm:$0xf]
    %v98 = vld [vmem:[#allocation2 + $0x74] sm:$0xf]
    %v99 = vld [vmem:[#allocation2 + $0x78] sm:$0xf]
    %v100 = vld [vmem:[#allocation2 + $0x7c] sm:$0xf]
    %v101 = vld [vmem:[#allocation2 + $0x80] sm:$0xf]
    %v102 = vld [vmem:[#allocation2 + $0x84] sm:$0xf]
    %v103 = vld [vmem:[#allocation2 + $0x88] sm:$0xf]
    %v104 = vld [vmem:[#allocation2 + $0x8c] sm:$0xf]
    %v105 = vld [vmem:[#allocation2 + $0x90] sm:$0xf]
    %v106 = vld [vmem:[#allocation2 + $0x94] sm:$0xf]
    %v107 = vld [vmem:[#allocation2 + $0x98] sm:$0xf]
    %v108 = vld [vmem:[#allocation2 + $0x9c] sm:$0xf]
    %v109 = vld [vmem:[#allocation2 + $0xa0] sm:$0xf]
    %v110 = vld [vmem:[#allocation2 + $0xa4] sm:$0xf]
    %v111 = vld [vmem:[#allocation2 + $0xa8] sm:$0xf]
    %v112 = vld [vmem:[#allocation2 + $0xac] sm:$0xf]
    %v113 = vld [vmem:[#allocation2 + $0xb0] sm:$0xf]
    %v114 = vld [vmem:[#allocation2 + $0xb4] sm:$0xf]
    %v115 = vld [vmem:[#allocation2 + $0xb8] sm:$0xf]
    %v116 = vld [vmem:[#allocation2 + $0xbc] sm:$0xf]
    %v117 = vld [vmem:[#allocation2 + $0xc0] sm:$0xf]
    %v118 = vld [vmem:[#allocation2 + $0xc4] sm:$0xf]
    %v119 = vld [vmem:[#allocation2 + $0xc8] sm:$0xf]
    %v120 = vld [vmem:[#allocation2 + $0xcc] sm:$0xf]
    %v121 = vld [vmem:[#allocation2 + $0xd0] sm:$0xf]
    %v122 = vld [vmem:[#allocation2 + $0xd4] sm:$0xf]
    %v123 = vld [vmem:[#allocation2 + $0xd8] sm:$0xf]
    %v124 = vld [vmem:[#allocation2 + $0xdc] sm:$0xf]
    %v125 = vld [vmem:[#allocation2 + $0xe0] sm:$0xf]
    %v126 = vld [vmem:[#allocation2 + $0xe4] sm:$0xf]
    %v127 = vld [vmem:[#allocation2 + $0xe8] sm:$0xf]
    %v128 = vld [vmem:[#allocation2 + $0xec] sm:$0xf]
    %v129 = vld [vmem:[#allocation2 + $0xf0] sm:$0xf]
    %v130 = vld [vmem:[#allocation2 + $0xf4] sm:$0xf]
    %v131 = vld [vmem:[#allocation2 + $0xf8] sm:$0xf]
    %v132 = vld [vmem:[#allocation2 + $0xfc] sm:$0xf]
    %v133 = vld [vmem:[#allocation2 + $0x100] sm:$0xf]
    %v134 = vld [vmem:[#allocation2 + $0x104] sm:$0xf]
    %v135 = vld [vmem:[#allocation2 + $0x108] sm:$0xf]
    %v136 = vld [vmem:[#allocation2 + $0x10c] sm:$0xf]
    %v137 = vld [vmem:[#allocation2 + $0x110] sm:$0xf]
    %v138 = vld [vmem:[#allocation2 + $0x114] sm:$0xf]
    %v139 = vld [vmem:[#allocation2 + $0x118] sm:$0xf]
    %v140 = vld [vmem:[#allocation2 + $0x11c] sm:$0xf]
    %v141 = vld [vmem:[#allocation2 + $0x120] sm:$0xf]
    %v142 = vld [vmem:[#allocation2 + $0x124] sm:$0xf]
    %v143 = vld [vmem:[#allocation2 + $0x128] sm:$0xf]
    %v144 = vld [vmem:[#allocation2 + $0x12c] sm:$0xf]
    %v145 = vld [vmem:[#allocation2 + $0x130] sm:$0xf]
    %v146 = vld [vmem:[#allocation2 + $0x134] sm:$0xf]
    %v147 = vld [vmem:[#allocation2 + $0x138] sm:$0xf]
    %v148 = vld [vmem:[#allocation2 + $0x13c] sm:$0xf]
    %v149 = vld [vmem:[#allocation2 + $0x140] sm:$0xf]
    %v150 = vld [vmem:[#allocation2 + $0x144] sm:$0xf]
    %v151 = vld [vmem:[#allocation2 + $0x148] sm:$0xf]
    %v152 = vld [vmem:[#allocation2 + $0x14c] sm:$0xf]
    %v153 = vld [vmem:[#allocation2 + $0x150] sm:$0xf]
    %v154 = vld [vmem:[#allocation2 + $0x154] sm:$0xf]
    %v155 = vld [vmem:[#allocation2 + $0x158] sm:$0xf]
    %v156 = vld [vmem:[#allocation2 + $0x15c] sm:$0xf]
    %v157 = vld [vmem:[#allocation2 + $0x160] sm:$0xf]
    %v158 = vld [vmem:[#allocation2 + $0x164] sm:$0xf]
    %v159 = vld [vmem:[#allocation2 + $0x168] sm:$0xf]
    %v160 = vld [vmem:[#allocation2 + $0x16c] sm:$0xf]
    %v161 = vld [vmem:[#allocation2 + $0x170] sm:$0xf]
    %v162 = vld [vmem:[#allocation2 + $0x174] sm:$0xf]
    %v163 = vld [vmem:[#allocation2 + $0x178] sm:$0xf]
    %v164 = vld [vmem:[#allocation2 + $0x17c] sm:$0xf]
    %v165 = vld [vmem:[#allocation2 + $0x180] sm:$0xf]
    %v166 = vld [vmem:[#allocation2 + $0x184] sm:$0xf]
    %v167 = vld [vmem:[#allocation2 + $0x188] sm:$0xf]
    %v168 = vld [vmem:[#allocation2 + $0x18c] sm:$0xf]
    %v169 = vld [vmem:[#allocation2 + $0x190] sm:$0xf]
    %v170 = vld [vmem:[#allocation2 + $0x194] sm:$0xf]
    %v171 = vld [vmem:[#allocation2 + $0x198] sm:$0xf]
    %v172 = vld [vmem:[#allocation2 + $0x19c] sm:$0xf]
    %v173 = vld [vmem:[#allocation2 + $0x1a0] sm:$0xf]
    %v174 = vld [vmem:[#allocation2 + $0x1a4] sm:$0xf]
    %v175 = vld [vmem:[#allocation2 + $0x1a8] sm:$0xf]
    %v176 = vld [vmem:[#allocation2 + $0x1ac] sm:$0xf]
    %v177 = vld [vmem:[#allocation2 + $0x1b0] sm:$0xf]
    %v178 = vld [vmem:[#allocation2 + $0x1b4] sm:$0xf]
    %v179 = vld [vmem:[#allocation2 + $0x1b8] sm:$0xf]
    %v180 = vld [vmem:[#allocation2 + $0x1bc] sm:$0xf]
    %v181 = vld [vmem:[#allocation2 + $0x1c0] sm:$0xf]
    %v182 = vld [vmem:[#allocation2 + $0x1c4] sm:$0xf]
    %v183 = vld [vmem:[#allocation2 + $0x1c8] sm:$0xf]
    %v184 = vld [vmem:[#allocation2 + $0x1cc] sm:$0xf]
    %v185 = vld [vmem:[#allocation2 + $0x1d0] sm:$0xf]
    %v186 = vld [vmem:[#allocation2 + $0x1d4] sm:$0xf]
    %v187 = vld [vmem:[#allocation2 + $0x1d8] sm:$0xf]
    %v188 = vld [vmem:[#allocation2 + $0x1dc] sm:$0xf]
    %v189 = vld [vmem:[#allocation2 + $0x1e0] sm:$0xf]
    %v190 = vld [vmem:[#allocation2 + $0x1e4] sm:$0xf]
    %v191 = vld [vmem:[#allocation2 + $0x1e8] sm:$0xf]
    %v192 = vld [vmem:[#allocation2 + $0x1ec] sm:$0xf]
    %v193 = vld [vmem:[#allocation2 + $0x1f0] sm:$0xf]
    %v194 = vld [vmem:[#allocation2 + $0x1f4] sm:$0xf]
    %v195 = vld [vmem:[#allocation2 + $0x1f8] sm:$0xf]
    %v196 = vld [vmem:[#allocation2 + $0x1fc] sm:$0xf]
    %v197 = vld [vmem:[#allocation5] sm:$0xf]
    %v198 = vld [vmem:[#allocation5 + $0x4] sm:$0xf]
    %v199 = vld [vmem:[#allocation5 + $0x8] sm:$0xf]
    %v200 = vld [vmem:[#allocation5 + $0xc] sm:$0xf]
    %v201 = vld [vmem:[#allocation5 + $0x10] sm:$0xf]
    %v202 = vld [vmem:[#allocation5 + $0x14] sm:$0xf]
    %v203 = vld [vmem:[#allocation5 + $0x18] sm:$0xf]
    %v204 = vld [vmem:[#allocation5 + $0x1c] sm:$0xf]
    %v205 = vld [vmem:[#allocation5 + $0x20] sm:$0xf]
    %v206 = vld [vmem:[#allocation5 + $0x24] sm:$0xf]
    %v207 = vld [vmem:[#allocation5 + $0x28] sm:$0xf]
    %v208 = vld [vmem:[#allocation5 + $0x2c] sm:$0xf]
    %v209 = vld [vmem:[#allocation5 + $0x30] sm:$0xf]
    %v210 = vld [vmem:[#allocation5 + $0x34] sm:$0xf]
    %v211 = vld [vmem:[#allocation5 + $0x38] sm:$0xf]
    %v212 = vld [vmem:[#allocation5 + $0x3c] sm:$0xf]
    %v213 = vld [vmem:[%s2] sm:$0x1]
    %v215 = vlaneseq
    %v216 = vshrl.u32 %v215, 7
    %v217 = vsub.s32 0, %v216
    %v218 = vrot.slane %v213, %v217
    %v348 = vunpack.c.l.b16 %v69
    %v349 = vunpack.c.l.b16 %v70
    %v350 = vunpack.c.l.b16 %v71
    %v351 = vunpack.c.l.b16 %v72
    %v352 = vunpack.c.l.b16 %v73
    %v353 = vunpack.c.l.b16 %v74
    %v354 = vunpack.c.l.b16 %v75
    %v355 = vunpack.c.l.b16 %v76
    %v356 = vunpack.c.l.b16 %v77
    %v357 = vunpack.c.l.b16 %v78
    %v358 = vunpack.c.l.b16 %v79
    %v359 = vunpack.c.l.b16 %v80
    %v360 = vunpack.c.l.b16 %v81
    %v361 = vunpack.c.l.b16 %v82
    %v362 = vunpack.c.l.b16 %v83
    %v363 = vunpack.c.l.b16 %v84
    %v364 = vunpack.c.l.b16 %v85
    %v365 = vunpack.c.l.b16 %v86
    %v366 = vunpack.c.l.b16 %v87
    %v367 = vunpack.c.l.b16 %v88
    %v368 = vunpack.c.l.b16 %v89
    %v369 = vunpack.c.l.b16 %v90
    %v370 = vunpack.c.l.b16 %v91
    %v371 = vunpack.c.l.b16 %v92
    %v372 = vunpack.c.l.b16 %v93
    %v373 = vunpack.c.l.b16 %v94
    %v374 = vunpack.c.l.b16 %v95
    %v375 = vunpack.c.l.b16 %v96
    %v376 = vunpack.c.l.b16 %v97
    %v377 = vunpack.c.l.b16 %v98
    %v378 = vunpack.c.l.b16 %v99
    %v379 = vunpack.c.l.b16 %v100
    %v380 = vunpack.c.l.b16 %v101
    %v381 = vunpack.c.l.b16 %v102
    %v382 = vunpack.c.l.b16 %v103
    %v383 = vunpack.c.l.b16 %v104
    %v384 = vunpack.c.l.b16 %v105
    %v385 = vunpack.c.l.b16 %v106
    %v386 = vunpack.c.l.b16 %v107
    %v387 = vunpack.c.l.b16 %v108
    %v388 = vunpack.c.l.b16 %v109
    %v389 = vunpack.c.l.b16 %v110
    %v390 = vunpack.c.l.b16 %v111
    %v391 = vunpack.c.l.b16 %v112
    %v392 = vunpack.c.l.b16 %v113
    %v393 = vunpack.c.l.b16 %v114
    %v394 = vunpack.c.l.b16 %v115
    %v395 = vunpack.c.l.b16 %v116
    %v396 = vunpack.c.l.b16 %v117
    %v397 = vunpack.c.l.b16 %v118
    %v398 = vunpack.c.l.b16 %v119
    %v399 = vunpack.c.l.b16 %v120
    %v400 = vunpack.c.l.b16 %v121
    %v401 = vunpack.c.l.b16 %v122
    %v402 = vunpack.c.l.b16 %v123
    %v403 = vunpack.c.l.b16 %v124
    %v404 = vunpack.c.l.b16 %v125
    %v405 = vunpack.c.l.b16 %v126
    %v406 = vunpack.c.l.b16 %v127
    %v407 = vunpack.c.l.b16 %v128
    %v408 = vunpack.c.l.b16 %v129
    %v409 = vunpack.c.l.b16 %v130
    %v410 = vunpack.c.l.b16 %v131
    %v411 = vunpack.c.l.b16 %v132
    %v412 = vunpack.c.l.b16 %v133
    %v413 = vunpack.c.l.b16 %v134
    %v414 = vunpack.c.l.b16 %v135
    %v415 = vunpack.c.l.b16 %v136
    %v416 = vunpack.c.l.b16 %v137
    %v417 = vunpack.c.l.b16 %v138
    %v418 = vunpack.c.l.b16 %v139
    %v419 = vunpack.c.l.b16 %v140
    %v420 = vunpack.c.l.b16 %v141
    %v421 = vunpack.c.l.b16 %v142
    %v422 = vunpack.c.l.b16 %v143
    %v423 = vunpack.c.l.b16 %v144
    %v424 = vunpack.c.l.b16 %v145
    %v425 = vunpack.c.l.b16 %v146
    %v426 = vunpack.c.l.b16 %v147
    %v427 = vunpack.c.l.b16 %v148
    %v428 = vunpack.c.l.b16 %v149
    %v429 = vunpack.c.l.b16 %v150
    %v430 = vunpack.c.l.b16 %v151
    %v431 = vunpack.c.l.b16 %v152
    %v432 = vunpack.c.l.b16 %v153
    %v433 = vunpack.c.l.b16 %v154
    %v434 = vunpack.c.l.b16 %v155
    %v435 = vunpack.c.l.b16 %v156
    %v436 = vunpack.c.l.b16 %v157
    %v437 = vunpack.c.l.b16 %v158
    %v438 = vunpack.c.l.b16 %v159
    %v439 = vunpack.c.l.b16 %v160
    %v440 = vunpack.c.l.b16 %v161
    %v441 = vunpack.c.l.b16 %v162
    %v442 = vunpack.c.l.b16 %v163
    %v443 = vunpack.c.l.b16 %v164
    %v444 = vunpack.c.l.b16 %v165
    %v445 = vunpack.c.l.b16 %v166
    %v446 = vunpack.c.l.b16 %v167
    %v447 = vunpack.c.l.b16 %v168
    %v448 = vunpack.c.l.b16 %v169
    %v449 = vunpack.c.l.b16 %v170
    %v450 = vunpack.c.l.b16 %v171
    %v451 = vunpack.c.l.b16 %v172
    %v452 = vunpack.c.l.b16 %v173
    %v453 = vunpack.c.l.b16 %v174
    %v454 = vunpack.c.l.b16 %v175
    %v455 = vunpack.c.l.b16 %v176
    %v456 = vunpack.c.l.b16 %v177
    %v457 = vunpack.c.l.b16 %v178
    %v458 = vunpack.c.l.b16 %v179
    %v459 = vunpack.c.l.b16 %v180
    %v460 = vunpack.c.l.b16 %v181
    %v461 = vunpack.c.l.b16 %v182
    %v462 = vunpack.c.l.b16 %v183
    %v463 = vunpack.c.l.b16 %v184
    %v464 = vunpack.c.l.b16 %v185
    %v465 = vunpack.c.l.b16 %v186
    %v466 = vunpack.c.l.b16 %v187
    %v467 = vunpack.c.l.b16 %v188
    %v468 = vunpack.c.l.b16 %v189
    %v469 = vunpack.c.l.b16 %v190
    %v470 = vunpack.c.l.b16 %v191
    %v471 = vunpack.c.l.b16 %v192
    %v472 = vunpack.c.l.b16 %v193
    %v473 = vunpack.c.l.b16 %v194
    %v474 = vunpack.c.l.b16 %v195
    %v475 = vunpack.c.l.b16 %v196
    %v476 = vpack.c.b16 %v349, %v348
    %v477 = vpack.c.b16 %v351, %v350
    %v478 = vpack.c.b16 %v353, %v352
    %v479 = vpack.c.b16 %v355, %v354
    %v480 = vpack.c.b16 %v357, %v356
    %v481 = vpack.c.b16 %v359, %v358
    %v482 = vpack.c.b16 %v361, %v360
    %v483 = vpack.c.b16 %v363, %v362
    %v484 = vpack.c.b16 %v365, %v364
    %v485 = vpack.c.b16 %v367, %v366
    %v486 = vpack.c.b16 %v369, %v368
    %v487 = vpack.c.b16 %v371, %v370
    %v488 = vpack.c.b16 %v373, %v372
    %v489 = vpack.c.b16 %v375, %v374
    %v490 = vpack.c.b16 %v377, %v376
    %v491 = vpack.c.b16 %v379, %v378
    %v492 = vpack.c.b16 %v381, %v380
    %v493 = vpack.c.b16 %v383, %v382
    %v494 = vpack.c.b16 %v385, %v384
    %v495 = vpack.c.b16 %v387, %v386
    %v496 = vpack.c.b16 %v389, %v388
    %v497 = vpack.c.b16 %v391, %v390
    %v498 = vpack.c.b16 %v393, %v392
    %v499 = vpack.c.b16 %v395, %v394
    %v500 = vpack.c.b16 %v397, %v396
    %v501 = vpack.c.b16 %v399, %v398
    %v502 = vpack.c.b16 %v401, %v400
    %v503 = vpack.c.b16 %v403, %v402
    %v504 = vpack.c.b16 %v405, %v404
    %v505 = vpack.c.b16 %v407, %v406
    %v506 = vpack.c.b16 %v409, %v408
    %v507 = vpack.c.b16 %v411, %v410
    %v508 = vpack.c.b16 %v413, %v412
    %v509 = vpack.c.b16 %v415, %v414
    %v510 = vpack.c.b16 %v417, %v416
    %v511 = vpack.c.b16 %v419, %v418
    %v512 = vpack.c.b16 %v421, %v420
    %v513 = vpack.c.b16 %v423, %v422
    %v514 = vpack.c.b16 %v425, %v424
    %v515 = vpack.c.b16 %v427, %v426
    %v516 = vpack.c.b16 %v429, %v428
    %v517 = vpack.c.b16 %v431, %v430
    %v518 = vpack.c.b16 %v433, %v432
    %v519 = vpack.c.b16 %v435, %v434
    %v520 = vpack.c.b16 %v437, %v436
    %v521 = vpack.c.b16 %v439, %v438
    %v522 = vpack.c.b16 %v441, %v440
    %v523 = vpack.c.b16 %v443, %v442
    %v524 = vpack.c.b16 %v445, %v444
    %v525 = vpack.c.b16 %v447, %v446
    %v526 = vpack.c.b16 %v449, %v448
    %v527 = vpack.c.b16 %v451, %v450
    %v528 = vpack.c.b16 %v453, %v452
    %v529 = vpack.c.b16 %v455, %v454
    %v530 = vpack.c.b16 %v457, %v456
    %v531 = vpack.c.b16 %v459, %v458
    %v532 = vpack.c.b16 %v461, %v460
    %v533 = vpack.c.b16 %v463, %v462
    %v534 = vpack.c.b16 %v465, %v464
    %v535 = vpack.c.b16 %v467, %v466
    %v536 = vpack.c.b16 %v469, %v468
    %v537 = vpack.c.b16 %v471, %v470
    %v538 = vpack.c.b16 %v473, %v472
    %v539 = vpack.c.b16 %v475, %v474
    %v620 = vunpack.c.l.b16 %v197
    %v621 = vunpack.c.l.b16 %v198
    %v622 = vunpack.c.l.b16 %v199
    %v623 = vunpack.c.l.b16 %v200
    %v624 = vunpack.c.l.b16 %v201
    %v625 = vunpack.c.l.b16 %v202
    %v626 = vunpack.c.l.b16 %v203
    %v627 = vunpack.c.l.b16 %v204
    %v628 = vunpack.c.l.b16 %v205
    %v629 = vunpack.c.l.b16 %v206
    %v630 = vunpack.c.l.b16 %v207
    %v631 = vunpack.c.l.b16 %v208
    %v632 = vunpack.c.l.b16 %v209
    %v633 = vunpack.c.l.b16 %v210
    %v634 = vunpack.c.l.b16 %v211
    %v635 = vunpack.c.l.b16 %v212
    %v636 = vpack.c.b16 %v621, %v620
    %v637 = vpack.c.b16 %v623, %v622
    %v638 = vpack.c.b16 %v625, %v624
    %v639 = vpack.c.b16 %v627, %v626
    %v640 = vpack.c.b16 %v629, %v628
    %v641 = vpack.c.b16 %v631, %v630
    %v642 = vpack.c.b16 %v633, %v632
    %v643 = vpack.c.b16 %v635, %v634
    %652 = vmatprep.subr.bf16.mxu0 0
    %653 = vmatpush1.bf16.msra.mxu0 %v643
    %654 = vmatprep.subr.bf16.mxu0 0
    %655 = vmatpush1.bf16.msra.mxu0 %v642
    %656 = vmatprep.subr.bf16.mxu0 0
    %657 = vmatpush1.bf16.msra.mxu0 %v641
    %658 = vmatprep.subr.bf16.mxu0 0
    %659 = vmatpush1.bf16.msra.mxu0 %v640
    %660 = vmatprep.subr.bf16.mxu0 0
    %661 = vmatpush1.bf16.msra.mxu0 %v639
    %662 = vmatprep.subr.bf16.mxu0 0
    %663 = vmatpush1.bf16.msra.mxu0 %v638
    %664 = vmatprep.subr.bf16.mxu0 0
    %665 = vmatpush1.bf16.msra.mxu0 %v637
    %666 = vmatprep.subr.bf16.mxu0 0
    %667 = vmatpush1.bf16.msra.mxu0 %v636
    %668 = vmatprep.subr.bf16.mxu0 0
    %669 = vmatpush2.bf16.msra.mxu0 0
    %670 = vmatprep.subr.bf16.mxu0 0
    %671 = vmatpush2.bf16.msra.mxu0 0
    %672 = vmatprep.subr.bf16.mxu0 0
    %673 = vmatpush2.bf16.msra.mxu0 0
    %674 = vmatprep.subr.bf16.mxu0 0
    %675 = vmatpush2.bf16.msra.mxu0 0
    %676 = vmatprep.subr.bf16.mxu0 0
    %677 = vmatpush2.bf16.msra.mxu0 0
    %678 = vmatprep.subr.bf16.mxu0 0
    %679 = vmatpush2.bf16.msra.mxu0 0
    %680 = vmatprep.subr.bf16.mxu0 0
    %681 = vmatpush2.bf16.msra.mxu0 0
    %682 = vmatprep.subr.bf16.mxu0 0
    %683 = vmatpush2.bf16.msra.mxu0 0
    %684 = vmatprep.mubr.bf16.mxu0 0
    %685 = vmatmul.mubr.bf16.gmra.mxu0 %v476
    %v686 = vpop.f32.mrf.mxu0
    %v687 = vadd.f32 %v218, %v686
    %v688 = vpop.f32.mrf.mxu0
    %v689 = vpop.f32.mrf.mxu0
    %v690 = vadd.f32 %v218, %v689
    %v691 = vpop.f32.mrf.mxu0
    %692 = vmatprep.mubr.bf16.mxu0 0
    %693 = vmatmul.mubr.bf16.gmra.mxu0 %v477
    %v694 = vpop.f32.mrf.mxu0
    %v695 = vadd.f32 %v218, %v694
    %v696 = vpop.f32.mrf.mxu0
    %v697 = vpop.f32.mrf.mxu0
    %v698 = vadd.f32 %v218, %v697
    %v699 = vpop.f32.mrf.mxu0
    %700 = vmatprep.mubr.bf16.mxu0 0
    %701 = vmatmul.mubr.bf16.gmra.mxu0 %v478
    %v702 = vpop.f32.mrf.mxu0
    %v703 = vadd.f32 %v218, %v702
    %v704 = vpop.f32.mrf.mxu0
    %v705 = vpop.f32.mrf.mxu0
    %v706 = vadd.f32 %v218, %v705
    %v707 = vpop.f32.mrf.mxu0
    %708 = vmatprep.mubr.bf16.mxu0 0
    %709 = vmatmul.mubr.bf16.gmra.mxu0 %v479
    %v710 = vpop.f32.mrf.mxu0
    %v711 = vadd.f32 %v218, %v710
    %v712 = vpop.f32.mrf.mxu0
    %v713 = vpop.f32.mrf.mxu0
    %v714 = vadd.f32 %v218, %v713
    %v715 = vpop.f32.mrf.mxu0
    %716 = vmatprep.mubr.bf16.mxu0 0
    %717 = vmatmul.mubr.bf16.gmra.mxu0 %v480
    %v718 = vpop.f32.mrf.mxu0
    %v719 = vadd.f32 %v218, %v718
    %v720 = vpop.f32.mrf.mxu0
    %v721 = vpop.f32.mrf.mxu0
    %v722 = vadd.f32 %v218, %v721
    %v723 = vpop.f32.mrf.mxu0
    %724 = vmatprep.mubr.bf16.mxu0 0
    %725 = vmatmul.mubr.bf16.gmra.mxu0 %v481
    %v726 = vpop.f32.mrf.mxu0
    %v727 = vadd.f32 %v218, %v726
    %v728 = vpop.f32.mrf.mxu0
    %v729 = vpop.f32.mrf.mxu0
    %v730 = vadd.f32 %v218, %v729
    %v731 = vpop.f32.mrf.mxu0
    %732 = vmatprep.mubr.bf16.mxu0 0
    %733 = vmatmul.mubr.bf16.gmra.mxu0 %v482
    %v734 = vpop.f32.mrf.mxu0
    %v735 = vadd.f32 %v218, %v734
    %v736 = vpop.f32.mrf.mxu0
    %v737 = vpop.f32.mrf.mxu0
    %v738 = vadd.f32 %v218, %v737
    %v739 = vpop.f32.mrf.mxu0
    %740 = vmatprep.mubr.bf16.mxu0 0
    %741 = vmatmul.mubr.bf16.gmra.mxu0 %v483
    %v742 = vpop.f32.mrf.mxu0
    %v743 = vadd.f32 %v218, %v742
    %v744 = vpop.f32.mrf.mxu0
    %v745 = vpop.f32.mrf.mxu0
    %v746 = vadd.f32 %v218, %v745
    %v747 = vpop.f32.mrf.mxu0
    %748 = vmatprep.mubr.bf16.mxu0 0
    %749 = vmatmul.mubr.bf16.gmra.mxu0 %v484
    %v750 = vpop.f32.mrf.mxu0
    %v751 = vadd.f32 %v218, %v750
    %v752 = vpop.f32.mrf.mxu0
    %v753 = vpop.f32.mrf.mxu0
    %v754 = vadd.f32 %v218, %v753
    %v755 = vpop.f32.mrf.mxu0
    %756 = vmatprep.mubr.bf16.mxu0 0
    %757 = vmatmul.mubr.bf16.gmra.mxu0 %v485
    %v758 = vpop.f32.mrf.mxu0
    %v759 = vadd.f32 %v218, %v758
    %v760 = vpop.f32.mrf.mxu0
    %v761 = vpop.f32.mrf.mxu0
    %v762 = vadd.f32 %v218, %v761
    %v763 = vpop.f32.mrf.mxu0
    %764 = vmatprep.mubr.bf16.mxu0 0
    %765 = vmatmul.mubr.bf16.gmra.mxu0 %v486
    %v766 = vpop.f32.mrf.mxu0
    %v767 = vadd.f32 %v218, %v766
    %v768 = vpop.f32.mrf.mxu0
    %v769 = vpop.f32.mrf.mxu0
    %v770 = vadd.f32 %v218, %v769
    %v771 = vpop.f32.mrf.mxu0
    %772 = vmatprep.mubr.bf16.mxu0 0
    %773 = vmatmul.mubr.bf16.gmra.mxu0 %v487
    %v774 = vpop.f32.mrf.mxu0
    %v775 = vadd.f32 %v218, %v774
    %v776 = vpop.f32.mrf.mxu0
    %v777 = vpop.f32.mrf.mxu0
    %v778 = vadd.f32 %v218, %v777
    %v779 = vpop.f32.mrf.mxu0
    %780 = vmatprep.mubr.bf16.mxu0 0
    %781 = vmatmul.mubr.bf16.gmra.mxu0 %v488
    %v782 = vpop.f32.mrf.mxu0
    %v783 = vadd.f32 %v218, %v782
    %v784 = vpop.f32.mrf.mxu0
    %v785 = vpop.f32.mrf.mxu0
    %v786 = vadd.f32 %v218, %v785
    %v787 = vpop.f32.mrf.mxu0
    %788 = vmatprep.mubr.bf16.mxu0 0
    %789 = vmatmul.mubr.bf16.gmra.mxu0 %v489
    %v790 = vpop.f32.mrf.mxu0
    %v791 = vadd.f32 %v218, %v790
    %v792 = vpop.f32.mrf.mxu0
    %v793 = vpop.f32.mrf.mxu0
    %v794 = vadd.f32 %v218, %v793
    %v795 = vpop.f32.mrf.mxu0
    %796 = vmatprep.mubr.bf16.mxu0 0
    %797 = vmatmul.mubr.bf16.gmra.mxu0 %v490
    %v798 = vpop.f32.mrf.mxu0
    %v799 = vadd.f32 %v218, %v798
    %v800 = vpop.f32.mrf.mxu0
    %v801 = vpop.f32.mrf.mxu0
    %v802 = vadd.f32 %v218, %v801
    %v803 = vpop.f32.mrf.mxu0
    %804 = vmatprep.mubr.bf16.mxu0 0
    %805 = vmatmul.mubr.bf16.gmra.mxu0 %v491
    %v806 = vpop.f32.mrf.mxu0
    %v807 = vadd.f32 %v218, %v806
    %v808 = vpop.f32.mrf.mxu0
    %v809 = vpop.f32.mrf.mxu0
    %v810 = vadd.f32 %v218, %v809
    %v811 = vpop.f32.mrf.mxu0
    %812 = vmatprep.mubr.bf16.mxu0 0
    %813 = vmatmul.mubr.bf16.gmra.mxu0 %v492
    %v814 = vpop.f32.mrf.mxu0
    %v815 = vadd.f32 %v218, %v814
    %v816 = vpop.f32.mrf.mxu0
    %v817 = vpop.f32.mrf.mxu0
    %v818 = vadd.f32 %v218, %v817
    %v819 = vpop.f32.mrf.mxu0
    %820 = vmatprep.mubr.bf16.mxu0 0
    %821 = vmatmul.mubr.bf16.gmra.mxu0 %v493
    %v822 = vpop.f32.mrf.mxu0
    %v823 = vadd.f32 %v218, %v822
    %v824 = vpop.f32.mrf.mxu0
    %v825 = vpop.f32.mrf.mxu0
    %v826 = vadd.f32 %v218, %v825
    %v827 = vpop.f32.mrf.mxu0
    %828 = vmatprep.mubr.bf16.mxu0 0
    %829 = vmatmul.mubr.bf16.gmra.mxu0 %v494
    %v830 = vpop.f32.mrf.mxu0
    %v831 = vadd.f32 %v218, %v830
    %v832 = vpop.f32.mrf.mxu0
    %v833 = vpop.f32.mrf.mxu0
    %v834 = vadd.f32 %v218, %v833
    %v835 = vpop.f32.mrf.mxu0
    %836 = vmatprep.mubr.bf16.mxu0 0
    %837 = vmatmul.mubr.bf16.gmra.mxu0 %v495
    %v838 = vpop.f32.mrf.mxu0
    %v839 = vadd.f32 %v218, %v838
    %v840 = vpop.f32.mrf.mxu0
    %v841 = vpop.f32.mrf.mxu0
    %v842 = vadd.f32 %v218, %v841
    %v843 = vpop.f32.mrf.mxu0
    %844 = vmatprep.mubr.bf16.mxu0 0
    %845 = vmatmul.mubr.bf16.gmra.mxu0 %v496
    %v846 = vpop.f32.mrf.mxu0
    %v847 = vadd.f32 %v218, %v846
    %v848 = vpop.f32.mrf.mxu0
    %v849 = vpop.f32.mrf.mxu0
    %v850 = vadd.f32 %v218, %v849
    %v851 = vpop.f32.mrf.mxu0
    %852 = vmatprep.mubr.bf16.mxu0 0
    %853 = vmatmul.mubr.bf16.gmra.mxu0 %v497
    %v854 = vpop.f32.mrf.mxu0
    %v855 = vadd.f32 %v218, %v854
    %v856 = vpop.f32.mrf.mxu0
    %v857 = vpop.f32.mrf.mxu0
    %v858 = vadd.f32 %v218, %v857
    %v859 = vpop.f32.mrf.mxu0
    %860 = vmatprep.mubr.bf16.mxu0 0
    %861 = vmatmul.mubr.bf16.gmra.mxu0 %v498
    %v862 = vpop.f32.mrf.mxu0
    %v863 = vadd.f32 %v218, %v862
    %v864 = vpop.f32.mrf.mxu0
    %v865 = vpop.f32.mrf.mxu0
    %v866 = vadd.f32 %v218, %v865
    %v867 = vpop.f32.mrf.mxu0
    %868 = vmatprep.mubr.bf16.mxu0 0
    %869 = vmatmul.mubr.bf16.gmra.mxu0 %v499
    %v870 = vpop.f32.mrf.mxu0
    %v871 = vadd.f32 %v218, %v870
    %v872 = vpop.f32.mrf.mxu0
    %v873 = vpop.f32.mrf.mxu0
    %v874 = vadd.f32 %v218, %v873
    %v875 = vpop.f32.mrf.mxu0
    %876 = vmatprep.mubr.bf16.mxu0 0
    %877 = vmatmul.mubr.bf16.gmra.mxu0 %v500
    %v878 = vpop.f32.mrf.mxu0
    %v879 = vadd.f32 %v218, %v878
    %v880 = vpop.f32.mrf.mxu0
    %v881 = vpop.f32.mrf.mxu0
    %v882 = vadd.f32 %v218, %v881
    %v883 = vpop.f32.mrf.mxu0
    %884 = vmatprep.mubr.bf16.mxu0 0
    %885 = vmatmul.mubr.bf16.gmra.mxu0 %v501
    %v886 = vpop.f32.mrf.mxu0
    %v887 = vadd.f32 %v218, %v886
    %v888 = vpop.f32.mrf.mxu0
    %v889 = vpop.f32.mrf.mxu0
    %v890 = vadd.f32 %v218, %v889
    %v891 = vpop.f32.mrf.mxu0
    %892 = vmatprep.mubr.bf16.mxu0 0
    %893 = vmatmul.mubr.bf16.gmra.mxu0 %v502
    %v894 = vpop.f32.mrf.mxu0
    %v895 = vadd.f32 %v218, %v894
    %v896 = vpop.f32.mrf.mxu0
    %v897 = vpop.f32.mrf.mxu0
    %v898 = vadd.f32 %v218, %v897
    %v899 = vpop.f32.mrf.mxu0
    %900 = vmatprep.mubr.bf16.mxu0 0
    %901 = vmatmul.mubr.bf16.gmra.mxu0 %v503
    %v902 = vpop.f32.mrf.mxu0
    %v903 = vadd.f32 %v218, %v902
    %v904 = vpop.f32.mrf.mxu0
    %v905 = vpop.f32.mrf.mxu0
    %v906 = vadd.f32 %v218, %v905
    %v907 = vpop.f32.mrf.mxu0
    %908 = vmatprep.mubr.bf16.mxu0 0
    %909 = vmatmul.mubr.bf16.gmra.mxu0 %v504
    %v910 = vpop.f32.mrf.mxu0
    %v911 = vadd.f32 %v218, %v910
    %v912 = vpop.f32.mrf.mxu0
    %v913 = vpop.f32.mrf.mxu0
    %v914 = vadd.f32 %v218, %v913
    %v915 = vpop.f32.mrf.mxu0
    %916 = vmatprep.mubr.bf16.mxu0 0
    %917 = vmatmul.mubr.bf16.gmra.mxu0 %v505
    %v918 = vpop.f32.mrf.mxu0
    %v919 = vadd.f32 %v218, %v918
    %v920 = vpop.f32.mrf.mxu0
    %v921 = vpop.f32.mrf.mxu0
    %v922 = vadd.f32 %v218, %v921
    %v923 = vpop.f32.mrf.mxu0
    %924 = vmatprep.mubr.bf16.mxu0 0
    %925 = vmatmul.mubr.bf16.gmra.mxu0 %v506
    %v926 = vpop.f32.mrf.mxu0
    %v927 = vadd.f32 %v218, %v926
    %v928 = vpop.f32.mrf.mxu0
    %v929 = vpop.f32.mrf.mxu0
    %v930 = vadd.f32 %v218, %v929
    %v931 = vpop.f32.mrf.mxu0
    %932 = vmatprep.mubr.bf16.mxu0 0
    %933 = vmatmul.mubr.bf16.gmra.mxu0 %v507
    %v934 = vpop.f32.mrf.mxu0
    %v935 = vadd.f32 %v218, %v934
    %v936 = vpop.f32.mrf.mxu0
    %v937 = vpop.f32.mrf.mxu0
    %v938 = vadd.f32 %v218, %v937
    %v939 = vpop.f32.mrf.mxu0
    %940 = vmatprep.mubr.bf16.mxu0 0
    %941 = vmatmul.mubr.bf16.gmra.mxu0 %v508
    %v942 = vpop.f32.mrf.mxu0
    %v943 = vadd.f32 %v218, %v942
    %v944 = vpop.f32.mrf.mxu0
    %v945 = vpop.f32.mrf.mxu0
    %v946 = vadd.f32 %v218, %v945
    %v947 = vpop.f32.mrf.mxu0
    %948 = vmatprep.mubr.bf16.mxu0 0
    %949 = vmatmul.mubr.bf16.gmra.mxu0 %v509
    %v950 = vpop.f32.mrf.mxu0
    %v951 = vadd.f32 %v218, %v950
    %v952 = vpop.f32.mrf.mxu0
    %v953 = vpop.f32.mrf.mxu0
    %v954 = vadd.f32 %v218, %v953
    %v955 = vpop.f32.mrf.mxu0
    %956 = vmatprep.mubr.bf16.mxu0 0
    %957 = vmatmul.mubr.bf16.gmra.mxu0 %v510
    %v958 = vpop.f32.mrf.mxu0
    %v959 = vadd.f32 %v218, %v958
    %v960 = vpop.f32.mrf.mxu0
    %v961 = vpop.f32.mrf.mxu0
    %v962 = vadd.f32 %v218, %v961
    %v963 = vpop.f32.mrf.mxu0
    %964 = vmatprep.mubr.bf16.mxu0 0
    %965 = vmatmul.mubr.bf16.gmra.mxu0 %v511
    %v966 = vpop.f32.mrf.mxu0
    %v967 = vadd.f32 %v218, %v966
    %v968 = vpop.f32.mrf.mxu0
    %v969 = vpop.f32.mrf.mxu0
    %v970 = vadd.f32 %v218, %v969
    %v971 = vpop.f32.mrf.mxu0
    %972 = vmatprep.mubr.bf16.mxu0 0
    %973 = vmatmul.mubr.bf16.gmra.mxu0 %v512
    %v974 = vpop.f32.mrf.mxu0
    %v975 = vadd.f32 %v218, %v974
    %v976 = vpop.f32.mrf.mxu0
    %v977 = vpop.f32.mrf.mxu0
    %v978 = vadd.f32 %v218, %v977
    %v979 = vpop.f32.mrf.mxu0
    %980 = vmatprep.mubr.bf16.mxu0 0
    %981 = vmatmul.mubr.bf16.gmra.mxu0 %v513
    %v982 = vpop.f32.mrf.mxu0
    %v983 = vadd.f32 %v218, %v982
    %v984 = vpop.f32.mrf.mxu0
    %v985 = vpop.f32.mrf.mxu0
    %v986 = vadd.f32 %v218, %v985
    %v987 = vpop.f32.mrf.mxu0
    %988 = vmatprep.mubr.bf16.mxu0 0
    %989 = vmatmul.mubr.bf16.gmra.mxu0 %v514
    %v990 = vpop.f32.mrf.mxu0
    %v991 = vadd.f32 %v218, %v990
    %v992 = vpop.f32.mrf.mxu0
    %v993 = vpop.f32.mrf.mxu0
    %v994 = vadd.f32 %v218, %v993
    %v995 = vpop.f32.mrf.mxu0
    %996 = vmatprep.mubr.bf16.mxu0 0
    %997 = vmatmul.mubr.bf16.gmra.mxu0 %v515
    %v998 = vpop.f32.mrf.mxu0
    %v999 = vadd.f32 %v218, %v998
    %v1000 = vpop.f32.mrf.mxu0
    %v1001 = vpop.f32.mrf.mxu0
    %v1002 = vadd.f32 %v218, %v1001
    %v1003 = vpop.f32.mrf.mxu0
    %1004 = vmatprep.mubr.bf16.mxu0 0
    %1005 = vmatmul.mubr.bf16.gmra.mxu0 %v516
    %v1006 = vpop.f32.mrf.mxu0
    %v1007 = vadd.f32 %v218, %v1006
    %v1008 = vpop.f32.mrf.mxu0
    %v1009 = vpop.f32.mrf.mxu0
    %v1010 = vadd.f32 %v218, %v1009
    %v1011 = vpop.f32.mrf.mxu0
    %1012 = vmatprep.mubr.bf16.mxu0 0
    %1013 = vmatmul.mubr.bf16.gmra.mxu0 %v517
    %v1014 = vpop.f32.mrf.mxu0
    %v1015 = vadd.f32 %v218, %v1014
    %v1016 = vpop.f32.mrf.mxu0
    %v1017 = vpop.f32.mrf.mxu0
    %v1018 = vadd.f32 %v218, %v1017
    %v1019 = vpop.f32.mrf.mxu0
    %1020 = vmatprep.mubr.bf16.mxu0 0
    %1021 = vmatmul.mubr.bf16.gmra.mxu0 %v518
    %v1022 = vpop.f32.mrf.mxu0
    %v1023 = vadd.f32 %v218, %v1022
    %v1024 = vpop.f32.mrf.mxu0
    %v1025 = vpop.f32.mrf.mxu0
    %v1026 = vadd.f32 %v218, %v1025
    %v1027 = vpop.f32.mrf.mxu0
    %1028 = vmatprep.mubr.bf16.mxu0 0
    %1029 = vmatmul.mubr.bf16.gmra.mxu0 %v519
    %v1030 = vpop.f32.mrf.mxu0
    %v1031 = vadd.f32 %v218, %v1030
    %v1032 = vpop.f32.mrf.mxu0
    %v1033 = vpop.f32.mrf.mxu0
    %v1034 = vadd.f32 %v218, %v1033
    %v1035 = vpop.f32.mrf.mxu0
    %1036 = vmatprep.mubr.bf16.mxu0 0
    %1037 = vmatmul.mubr.bf16.gmra.mxu0 %v520
    %v1038 = vpop.f32.mrf.mxu0
    %v1039 = vadd.f32 %v218, %v1038
    %v1040 = vpop.f32.mrf.mxu0
    %v1041 = vpop.f32.mrf.mxu0
    %v1042 = vadd.f32 %v218, %v1041
    %v1043 = vpop.f32.mrf.mxu0
    %1044 = vmatprep.mubr.bf16.mxu0 0
    %1045 = vmatmul.mubr.bf16.gmra.mxu0 %v521
    %v1046 = vpop.f32.mrf.mxu0
    %v1047 = vadd.f32 %v218, %v1046
    %v1048 = vpop.f32.mrf.mxu0
    %v1049 = vpop.f32.mrf.mxu0
    %v1050 = vadd.f32 %v218, %v1049
    %v1051 = vpop.f32.mrf.mxu0
    %1052 = vmatprep.mubr.bf16.mxu0 0
    %1053 = vmatmul.mubr.bf16.gmra.mxu0 %v522
    %v1054 = vpop.f32.mrf.mxu0
    %v1055 = vadd.f32 %v218, %v1054
    %v1056 = vpop.f32.mrf.mxu0
    %v1057 = vpop.f32.mrf.mxu0
    %v1058 = vadd.f32 %v218, %v1057
    %v1059 = vpop.f32.mrf.mxu0
    %1060 = vmatprep.mubr.bf16.mxu0 0
    %1061 = vmatmul.mubr.bf16.gmra.mxu0 %v523
    %v1062 = vpop.f32.mrf.mxu0
    %v1063 = vadd.f32 %v218, %v1062
    %v1064 = vpop.f32.mrf.mxu0
    %v1065 = vpop.f32.mrf.mxu0
    %v1066 = vadd.f32 %v218, %v1065
    %v1067 = vpop.f32.mrf.mxu0
    %1068 = vmatprep.mubr.bf16.mxu0 0
    %1069 = vmatmul.mubr.bf16.gmra.mxu0 %v524
    %v1070 = vpop.f32.mrf.mxu0
    %v1071 = vadd.f32 %v218, %v1070
    %v1072 = vpop.f32.mrf.mxu0
    %v1073 = vpop.f32.mrf.mxu0
    %v1074 = vadd.f32 %v218, %v1073
    %v1075 = vpop.f32.mrf.mxu0
    %1076 = vmatprep.mubr.bf16.mxu0 0
    %1077 = vmatmul.mubr.bf16.gmra.mxu0 %v525
    %v1078 = vpop.f32.mrf.mxu0
    %v1079 = vadd.f32 %v218, %v1078
    %v1080 = vpop.f32.mrf.mxu0
    %v1081 = vpop.f32.mrf.mxu0
    %v1082 = vadd.f32 %v218, %v1081
    %v1083 = vpop.f32.mrf.mxu0
    %1084 = vmatprep.mubr.bf16.mxu0 0
    %1085 = vmatmul.mubr.bf16.gmra.mxu0 %v526
    %v1086 = vpop.f32.mrf.mxu0
    %v1087 = vadd.f32 %v218, %v1086
    %v1088 = vpop.f32.mrf.mxu0
    %v1089 = vpop.f32.mrf.mxu0
    %v1090 = vadd.f32 %v218, %v1089
    %v1091 = vpop.f32.mrf.mxu0
    %1092 = vmatprep.mubr.bf16.mxu0 0
    %1093 = vmatmul.mubr.bf16.gmra.mxu0 %v527
    %v1094 = vpop.f32.mrf.mxu0
    %v1095 = vadd.f32 %v218, %v1094
    %v1096 = vpop.f32.mrf.mxu0
    %v1097 = vpop.f32.mrf.mxu0
    %v1098 = vadd.f32 %v218, %v1097
    %v1099 = vpop.f32.mrf.mxu0
    %1100 = vmatprep.mubr.bf16.mxu0 0
    %1101 = vmatmul.mubr.bf16.gmra.mxu0 %v528
    %v1102 = vpop.f32.mrf.mxu0
    %v1103 = vadd.f32 %v218, %v1102
    %v1104 = vpop.f32.mrf.mxu0
    %v1105 = vpop.f32.mrf.mxu0
    %v1106 = vadd.f32 %v218, %v1105
    %v1107 = vpop.f32.mrf.mxu0
    %1108 = vmatprep.mubr.bf16.mxu0 0
    %1109 = vmatmul.mubr.bf16.gmra.mxu0 %v529
    %v1110 = vpop.f32.mrf.mxu0
    %v1111 = vadd.f32 %v218, %v1110
    %v1112 = vpop.f32.mrf.mxu0
    %v1113 = vpop.f32.mrf.mxu0
    %v1114 = vadd.f32 %v218, %v1113
    %v1115 = vpop.f32.mrf.mxu0
    %1116 = vmatprep.mubr.bf16.mxu0 0
    %1117 = vmatmul.mubr.bf16.gmra.mxu0 %v530
    %v1118 = vpop.f32.mrf.mxu0
    %v1119 = vadd.f32 %v218, %v1118
    %v1120 = vpop.f32.mrf.mxu0
    %v1121 = vpop.f32.mrf.mxu0
    %v1122 = vadd.f32 %v218, %v1121
    %v1123 = vpop.f32.mrf.mxu0
    %1124 = vmatprep.mubr.bf16.mxu0 0
    %1125 = vmatmul.mubr.bf16.gmra.mxu0 %v531
    %v1126 = vpop.f32.mrf.mxu0
    %v1127 = vadd.f32 %v218, %v1126
    %v1128 = vpop.f32.mrf.mxu0
    %v1129 = vpop.f32.mrf.mxu0
    %v1130 = vadd.f32 %v218, %v1129
    %v1131 = vpop.f32.mrf.mxu0
    %1132 = vmatprep.mubr.bf16.mxu0 0
    %1133 = vmatmul.mubr.bf16.gmra.mxu0 %v532
    %v1134 = vpop.f32.mrf.mxu0
    %v1135 = vadd.f32 %v218, %v1134
    %v1136 = vpop.f32.mrf.mxu0
    %v1137 = vpop.f32.mrf.mxu0
    %v1138 = vadd.f32 %v218, %v1137
    %v1139 = vpop.f32.mrf.mxu0
    %1140 = vmatprep.mubr.bf16.mxu0 0
    %1141 = vmatmul.mubr.bf16.gmra.mxu0 %v533
    %v1142 = vpop.f32.mrf.mxu0
    %v1143 = vadd.f32 %v218, %v1142
    %v1144 = vpop.f32.mrf.mxu0
    %v1145 = vpop.f32.mrf.mxu0
    %v1146 = vadd.f32 %v218, %v1145
    %v1147 = vpop.f32.mrf.mxu0
    %1148 = vmatprep.mubr.bf16.mxu0 0
    %1149 = vmatmul.mubr.bf16.gmra.mxu0 %v534
    %v1150 = vpop.f32.mrf.mxu0
    %v1151 = vadd.f32 %v218, %v1150
    %v1152 = vpop.f32.mrf.mxu0
    %v1153 = vpop.f32.mrf.mxu0
    %v1154 = vadd.f32 %v218, %v1153
    %v1155 = vpop.f32.mrf.mxu0
    %1156 = vmatprep.mubr.bf16.mxu0 0
    %1157 = vmatmul.mubr.bf16.gmra.mxu0 %v535
    %v1158 = vpop.f32.mrf.mxu0
    %v1159 = vadd.f32 %v218, %v1158
    %v1160 = vpop.f32.mrf.mxu0
    %v1161 = vpop.f32.mrf.mxu0
    %v1162 = vadd.f32 %v218, %v1161
    %v1163 = vpop.f32.mrf.mxu0
    %1164 = vmatprep.mubr.bf16.mxu0 0
    %1165 = vmatmul.mubr.bf16.gmra.mxu0 %v536
    %v1166 = vpop.f32.mrf.mxu0
    %v1167 = vadd.f32 %v218, %v1166
    %v1168 = vpop.f32.mrf.mxu0
    %v1169 = vpop.f32.mrf.mxu0
    %v1170 = vadd.f32 %v218, %v1169
    %v1171 = vpop.f32.mrf.mxu0
    %1172 = vmatprep.mubr.bf16.mxu0 0
    %1173 = vmatmul.mubr.bf16.gmra.mxu0 %v537
    %v1174 = vpop.f32.mrf.mxu0
    %v1175 = vadd.f32 %v218, %v1174
    %v1176 = vpop.f32.mrf.mxu0
    %v1177 = vpop.f32.mrf.mxu0
    %v1178 = vadd.f32 %v218, %v1177
    %v1179 = vpop.f32.mrf.mxu0
    %1180 = vmatprep.mubr.bf16.mxu0 0
    %1181 = vmatmul.mubr.bf16.gmra.mxu0 %v538
    %v1182 = vpop.f32.mrf.mxu0
    %v1183 = vadd.f32 %v218, %v1182
    %v1184 = vpop.f32.mrf.mxu0
    %v1185 = vpop.f32.mrf.mxu0
    %v1186 = vadd.f32 %v218, %v1185
    %v1187 = vpop.f32.mrf.mxu0
    %1188 = vmatprep.mubr.bf16.mxu0 0
    %1189 = vmatmul.mubr.bf16.gmra.mxu0 %v539
    %v1190 = vpop.f32.mrf.mxu0
    %v1191 = vadd.f32 %v218, %v1190
    %v1192 = vpop.f32.mrf.mxu0
    %v1193 = vpop.f32.mrf.mxu0
    %v1194 = vadd.f32 %v218, %v1193
    %v1195 = vpop.f32.mrf.mxu0
    %1196 = vdwg.mxu0
    %v1197 = vmax.f32 %v687, 0.0
    %v1198 = vmax.f32 %v690, 0.0
    %v1199 = vmax.f32 %v695, 0.0
    %v1200 = vmax.f32 %v698, 0.0
    %v1201 = vmax.f32 %v703, 0.0
    %v1202 = vmax.f32 %v706, 0.0
    %v1203 = vmax.f32 %v711, 0.0
    %v1204 = vmax.f32 %v714, 0.0
    %v1205 = vmax.f32 %v719, 0.0
    %v1206 = vmax.f32 %v722, 0.0
    %v1207 = vmax.f32 %v727, 0.0
    %v1208 = vmax.f32 %v730, 0.0
    %v1209 = vmax.f32 %v735, 0.0
    %v1210 = vmax.f32 %v738, 0.0
    %v1211 = vmax.f32 %v743, 0.0
    %v1212 = vmax.f32 %v746, 0.0
    %v1213 = vmax.f32 %v751, 0.0
    %v1214 = vmax.f32 %v754, 0.0
    %v1215 = vmax.f32 %v759, 0.0
    %v1216 = vmax.f32 %v762, 0.0
    %v1217 = vmax.f32 %v767, 0.0
    %v1218 = vmax.f32 %v770, 0.0
    %v1219 = vmax.f32 %v775, 0.0
    %v1220 = vmax.f32 %v778, 0.0
    %v1221 = vmax.f32 %v783, 0.0
    %v1222 = vmax.f32 %v786, 0.0
    %v1223 = vmax.f32 %v791, 0.0
    %v1224 = vmax.f32 %v794, 0.0
    %v1225 = vmax.f32 %v799, 0.0
    %v1226 = vmax.f32 %v802, 0.0
    %v1227 = vmax.f32 %v807, 0.0
    %v1228 = vmax.f32 %v810, 0.0
    %v1229 = vmax.f32 %v815, 0.0
    %v1230 = vmax.f32 %v818, 0.0
    %v1231 = vmax.f32 %v823, 0.0
    %v1232 = vmax.f32 %v826, 0.0
    %v1233 = vmax.f32 %v831, 0.0
    %v1234 = vmax.f32 %v834, 0.0
    %v1235 = vmax.f32 %v839, 0.0
    %v1236 = vmax.f32 %v842, 0.0
    %v1237 = vmax.f32 %v847, 0.0
    %v1238 = vmax.f32 %v850, 0.0
    %v1239 = vmax.f32 %v855, 0.0
    %v1240 = vmax.f32 %v858, 0.0
    %v1241 = vmax.f32 %v863, 0.0
    %v1242 = vmax.f32 %v866, 0.0
    %v1243 = vmax.f32 %v871, 0.0
    %v1244 = vmax.f32 %v874, 0.0
    %v1245 = vmax.f32 %v879, 0.0
    %v1246 = vmax.f32 %v882, 0.0
    %v1247 = vmax.f32 %v887, 0.0
    %v1248 = vmax.f32 %v890, 0.0
    %v1249 = vmax.f32 %v895, 0.0
    %v1250 = vmax.f32 %v898, 0.0
    %v1251 = vmax.f32 %v903, 0.0
    %v1252 = vmax.f32 %v906, 0.0
    %v1253 = vmax.f32 %v911, 0.0
    %v1254 = vmax.f32 %v914, 0.0
    %v1255 = vmax.f32 %v919, 0.0
    %v1256 = vmax.f32 %v922, 0.0
    %v1257 = vmax.f32 %v927, 0.0
    %v1258 = vmax.f32 %v930, 0.0
    %v1259 = vmax.f32 %v935, 0.0
    %v1260 = vmax.f32 %v938, 0.0
    %v1261 = vmax.f32 %v943, 0.0
    %v1262 = vmax.f32 %v946, 0.0
    %v1263 = vmax.f32 %v951, 0.0
    %v1264 = vmax.f32 %v954, 0.0
    %v1265 = vmax.f32 %v959, 0.0
    %v1266 = vmax.f32 %v962, 0.0
    %v1267 = vmax.f32 %v967, 0.0
    %v1268 = vmax.f32 %v970, 0.0
    %v1269 = vmax.f32 %v975, 0.0
    %v1270 = vmax.f32 %v978, 0.0
    %v1271 = vmax.f32 %v983, 0.0
    %v1272 = vmax.f32 %v986, 0.0
    %v1273 = vmax.f32 %v991, 0.0
    %v1274 = vmax.f32 %v994, 0.0
    %v1275 = vmax.f32 %v999, 0.0
    %v1276 = vmax.f32 %v1002, 0.0
    %v1277 = vmax.f32 %v1007, 0.0
    %v1278 = vmax.f32 %v1010, 0.0
    %v1279 = vmax.f32 %v1015, 0.0
    %v1280 = vmax.f32 %v1018, 0.0
    %v1281 = vmax.f32 %v1023, 0.0
    %v1282 = vmax.f32 %v1026, 0.0
    %v1283 = vmax.f32 %v1031, 0.0
    %v1284 = vmax.f32 %v1034, 0.0
    %v1285 = vmax.f32 %v1039, 0.0
    %v1286 = vmax.f32 %v1042, 0.0
    %v1287 = vmax.f32 %v1047, 0.0
    %v1288 = vmax.f32 %v1050, 0.0
    %v1289 = vmax.f32 %v1055, 0.0
    %v1290 = vmax.f32 %v1058, 0.0
    %v1291 = vmax.f32 %v1063, 0.0
    %v1292 = vmax.f32 %v1066, 0.0
    %v1293 = vmax.f32 %v1071, 0.0
    %v1294 = vmax.f32 %v1074, 0.0
    %v1295 = vmax.f32 %v1079, 0.0
    %v1296 = vmax.f32 %v1082, 0.0
    %v1297 = vmax.f32 %v1087, 0.0
    %v1298 = vmax.f32 %v1090, 0.0
    %v1299 = vmax.f32 %v1095, 0.0
    %v1300 = vmax.f32 %v1098, 0.0
    %v1301 = vmax.f32 %v1103, 0.0
    %v1302 = vmax.f32 %v1106, 0.0
    %v1303 = vmax.f32 %v1111, 0.0
    %v1304 = vmax.f32 %v1114, 0.0
    %v1305 = vmax.f32 %v1119, 0.0
    %v1306 = vmax.f32 %v1122, 0.0
    %v1307 = vmax.f32 %v1127, 0.0
    %v1308 = vmax.f32 %v1130, 0.0
    %v1309 = vmax.f32 %v1135, 0.0
    %v1310 = vmax.f32 %v1138, 0.0
    %v1311 = vmax.f32 %v1143, 0.0
    %v1312 = vmax.f32 %v1146, 0.0
    %v1313 = vmax.f32 %v1151, 0.0
    %v1314 = vmax.f32 %v1154, 0.0
    %v1315 = vmax.f32 %v1159, 0.0
    %v1316 = vmax.f32 %v1162, 0.0
    %v1317 = vmax.f32 %v1167, 0.0
    %v1318 = vmax.f32 %v1170, 0.0
    %v1319 = vmax.f32 %v1175, 0.0
    %v1320 = vmax.f32 %v1178, 0.0
    %v1321 = vmax.f32 %v1183, 0.0
    %v1322 = vmax.f32 %v1186, 0.0
    %v1323 = vmax.f32 %v1191, 0.0
    %v1324 = vmax.f32 %v1194, 0.0
    %v1325 = vpack.c.bf16 %v1198, %v1197
    %v1326 = vpack.c.bf16 %v1200, %v1199
    %v1327 = vpack.c.bf16 %v1202, %v1201
    %v1328 = vpack.c.bf16 %v1204, %v1203
    %v1329 = vpack.c.bf16 %v1206, %v1205
    %v1330 = vpack.c.bf16 %v1208, %v1207
    %v1331 = vpack.c.bf16 %v1210, %v1209
    %v1332 = vpack.c.bf16 %v1212, %v1211
    %v1333 = vpack.c.bf16 %v1214, %v1213
    %v1334 = vpack.c.bf16 %v1216, %v1215
    %v1335 = vpack.c.bf16 %v1218, %v1217
    %v1336 = vpack.c.bf16 %v1220, %v1219
    %v1337 = vpack.c.bf16 %v1222, %v1221
    %v1338 = vpack.c.bf16 %v1224, %v1223
    %v1339 = vpack.c.bf16 %v1226, %v1225
    %v1340 = vpack.c.bf16 %v1228, %v1227
    %v1341 = vpack.c.bf16 %v1230, %v1229
    %v1342 = vpack.c.bf16 %v1232, %v1231
    %v1343 = vpack.c.bf16 %v1234, %v1233
    %v1344 = vpack.c.bf16 %v1236, %v1235
    %v1345 = vpack.c.bf16 %v1238, %v1237
    %v1346 = vpack.c.bf16 %v1240, %v1239
    %v1347 = vpack.c.bf16 %v1242, %v1241
    %v1348 = vpack.c.bf16 %v1244, %v1243
    %v1349 = vpack.c.bf16 %v1246, %v1245
    %v1350 = vpack.c.bf16 %v1248, %v1247
    %v1351 = vpack.c.bf16 %v1250, %v1249
    %v1352 = vpack.c.bf16 %v1252, %v1251
    %v1353 = vpack.c.bf16 %v1254, %v1253
    %v1354 = vpack.c.bf16 %v1256, %v1255
    %v1355 = vpack.c.bf16 %v1258, %v1257
    %v1356 = vpack.c.bf16 %v1260, %v1259
    %v1357 = vpack.c.bf16 %v1262, %v1261
    %v1358 = vpack.c.bf16 %v1264, %v1263
    %v1359 = vpack.c.bf16 %v1266, %v1265
    %v1360 = vpack.c.bf16 %v1268, %v1267
    %v1361 = vpack.c.bf16 %v1270, %v1269
    %v1362 = vpack.c.bf16 %v1272, %v1271
    %v1363 = vpack.c.bf16 %v1274, %v1273
    %v1364 = vpack.c.bf16 %v1276, %v1275
    %v1365 = vpack.c.bf16 %v1278, %v1277
    %v1366 = vpack.c.bf16 %v1280, %v1279
    %v1367 = vpack.c.bf16 %v1282, %v1281
    %v1368 = vpack.c.bf16 %v1284, %v1283
    %v1369 = vpack.c.bf16 %v1286, %v1285
    %v1370 = vpack.c.bf16 %v1288, %v1287
    %v1371 = vpack.c.bf16 %v1290, %v1289
    %v1372 = vpack.c.bf16 %v1292, %v1291
    %v1373 = vpack.c.bf16 %v1294, %v1293
    %v1374 = vpack.c.bf16 %v1296, %v1295
    %v1375 = vpack.c.bf16 %v1298, %v1297
    %v1376 = vpack.c.bf16 %v1300, %v1299
    %v1377 = vpack.c.bf16 %v1302, %v1301
    %v1378 = vpack.c.bf16 %v1304, %v1303
    %v1379 = vpack.c.bf16 %v1306, %v1305
    %v1380 = vpack.c.bf16 %v1308, %v1307
    %v1381 = vpack.c.bf16 %v1310, %v1309
    %v1382 = vpack.c.bf16 %v1312, %v1311
    %v1383 = vpack.c.bf16 %v1314, %v1313
    %v1384 = vpack.c.bf16 %v1316, %v1315
    %v1385 = vpack.c.bf16 %v1318, %v1317
    %v1386 = vpack.c.bf16 %v1320, %v1319
    %v1387 = vpack.c.bf16 %v1322, %v1321
    %v1388 = vpack.c.bf16 %v1324, %v1323
    %v1389 = vld [vmem:[#allocation7] sm:$0xf]
    %v1390 = vld [vmem:[#allocation7 + $0x4] sm:$0xf]
    %v1391 = vld [vmem:[#allocation7 + $0x8] sm:$0xf]
    %v1392 = vld [vmem:[#allocation7 + $0xc] sm:$0xf]
    %v1393 = vld [vmem:[#allocation7 + $0x10] sm:$0xf]
    %v1394 = vld [vmem:[#allocation7 + $0x14] sm:$0xf]
    %v1395 = vld [vmem:[#allocation7 + $0x18] sm:$0xf]
    %v1396 = vld [vmem:[#allocation7 + $0x1c] sm:$0xf]
    %v1397 = vld [vmem:[#allocation7 + $0x20] sm:$0xf]
    %v1398 = vld [vmem:[#allocation7 + $0x24] sm:$0xf]
    %v1399 = vld [vmem:[#allocation7 + $0x28] sm:$0xf]
    %v1400 = vld [vmem:[#allocation7 + $0x2c] sm:$0xf]
    %v1401 = vld [vmem:[#allocation7 + $0x30] sm:$0xf]
    %v1402 = vld [vmem:[#allocation7 + $0x34] sm:$0xf]
    %v1403 = vld [vmem:[#allocation7 + $0x38] sm:$0xf]
    %v1404 = vld [vmem:[#allocation7 + $0x3c] sm:$0xf]
    %v1405 = vld [vmem:[%s4] sm:$0x1]
    %v1407 = vlaneseq
    %v1408 = vshrl.u32 %v1407, 7
    %v1409 = vsub.s32 0, %v1408
    %v1410 = vrot.slane %v1405, %v1409
    %v1428 = vunpack.c.l.b16 %v1389
    %v1429 = vunpack.c.l.b16 %v1390
    %v1430 = vunpack.c.l.b16 %v1391
    %v1431 = vunpack.c.l.b16 %v1392
    %v1432 = vunpack.c.l.b16 %v1393
    %v1433 = vunpack.c.l.b16 %v1394
    %v1434 = vunpack.c.l.b16 %v1395
    %v1435 = vunpack.c.l.b16 %v1396
    %v1436 = vunpack.c.l.b16 %v1397
    %v1437 = vunpack.c.l.b16 %v1398
    %v1438 = vunpack.c.l.b16 %v1399
    %v1439 = vunpack.c.l.b16 %v1400
    %v1440 = vunpack.c.l.b16 %v1401
    %v1441 = vunpack.c.l.b16 %v1402
    %v1442 = vunpack.c.l.b16 %v1403
    %v1443 = vunpack.c.l.b16 %v1404
    %v1444 = vpack.c.b16 %v1429, %v1428
    %v1445 = vpack.c.b16 %v1431, %v1430
    %v1446 = vpack.c.b16 %v1433, %v1432
    %v1447 = vpack.c.b16 %v1435, %v1434
    %v1448 = vpack.c.b16 %v1437, %v1436
    %v1449 = vpack.c.b16 %v1439, %v1438
    %v1450 = vpack.c.b16 %v1441, %v1440
    %v1451 = vpack.c.b16 %v1443, %v1442
    %1460 = vmatprep.subr.bf16.mxu0 0
    %1461 = vmatpush1.bf16.msra.mxu0 %v1451
    %1462 = vmatprep.subr.bf16.mxu0 0
    %1463 = vmatpush1.bf16.msra.mxu0 %v1450
    %1464 = vmatprep.subr.bf16.mxu0 0
    %1465 = vmatpush1.bf16.msra.mxu0 %v1449
    %1466 = vmatprep.subr.bf16.mxu0 0
    %1467 = vmatpush1.bf16.msra.mxu0 %v1448
    %1468 = vmatprep.subr.bf16.mxu0 0
    %1469 = vmatpush1.bf16.msra.mxu0 %v1447
    %1470 = vmatprep.subr.bf16.mxu0 0
    %1471 = vmatpush1.bf16.msra.mxu0 %v1446
    %1472 = vmatprep.subr.bf16.mxu0 0
    %1473 = vmatpush1.bf16.msra.mxu0 %v1445
    %1474 = vmatprep.subr.bf16.mxu0 0
    %1475 = vmatpush1.bf16.msra.mxu0 %v1444
    %1476 = vmatprep.subr.bf16.mxu0 0
    %1477 = vmatpush2.bf16.msra.mxu0 0
    %1478 = vmatprep.subr.bf16.mxu0 0
    %1479 = vmatpush2.bf16.msra.mxu0 0
    %1480 = vmatprep.subr.bf16.mxu0 0
    %1481 = vmatpush2.bf16.msra.mxu0 0
    %1482 = vmatprep.subr.bf16.mxu0 0
    %1483 = vmatpush2.bf16.msra.mxu0 0
    %1484 = vmatprep.subr.bf16.mxu0 0
    %1485 = vmatpush2.bf16.msra.mxu0 0
    %1486 = vmatprep.subr.bf16.mxu0 0
    %1487 = vmatpush2.bf16.msra.mxu0 0
    %1488 = vmatprep.subr.bf16.mxu0 0
    %1489 = vmatpush2.bf16.msra.mxu0 0
    %1490 = vmatprep.subr.bf16.mxu0 0
    %1491 = vmatpush2.bf16.msra.mxu0 0
    %1492 = vmatprep.mubr.bf16.mxu0 0
    %1493 = vmatmul.mubr.bf16.gmra.mxu0 %v1325
    %v1494 = vpop.f32.mrf.mxu0
    %v1495 = vadd.f32 %v1410, %v1494
    %v1496 = vpop.f32.mrf.mxu0
    %v1497 = vpop.f32.mrf.mxu0
    %v1498 = vadd.f32 %v1410, %v1497
    %v1499 = vpop.f32.mrf.mxu0
    %1500 = vmatprep.mubr.bf16.mxu0 0
    %1501 = vmatmul.mubr.bf16.gmra.mxu0 %v1326
    %v1502 = vpop.f32.mrf.mxu0
    %v1503 = vadd.f32 %v1410, %v1502
    %v1504 = vpop.f32.mrf.mxu0
    %v1505 = vpop.f32.mrf.mxu0
    %v1506 = vadd.f32 %v1410, %v1505
    %v1507 = vpop.f32.mrf.mxu0
    %1508 = vmatprep.mubr.bf16.mxu0 0
    %1509 = vmatmul.mubr.bf16.gmra.mxu0 %v1327
    %v1510 = vpop.f32.mrf.mxu0
    %v1511 = vadd.f32 %v1410, %v1510
    %v1512 = vpop.f32.mrf.mxu0
    %v1513 = vpop.f32.mrf.mxu0
    %v1514 = vadd.f32 %v1410, %v1513
    %v1515 = vpop.f32.mrf.mxu0
    %1516 = vmatprep.mubr.bf16.mxu0 0
    %1517 = vmatmul.mubr.bf16.gmra.mxu0 %v1328
    %v1518 = vpop.f32.mrf.mxu0
    %v1519 = vadd.f32 %v1410, %v1518
    %v1520 = vpop.f32.mrf.mxu0
    %v1521 = vpop.f32.mrf.mxu0
    %v1522 = vadd.f32 %v1410, %v1521
    %v1523 = vpop.f32.mrf.mxu0
    %1524 = vmatprep.mubr.bf16.mxu0 0
    %1525 = vmatmul.mubr.bf16.gmra.mxu0 %v1329
    %v1526 = vpop.f32.mrf.mxu0
    %v1527 = vadd.f32 %v1410, %v1526
    %v1528 = vpop.f32.mrf.mxu0
    %v1529 = vpop.f32.mrf.mxu0
    %v1530 = vadd.f32 %v1410, %v1529
    %v1531 = vpop.f32.mrf.mxu0
    %1532 = vmatprep.mubr.bf16.mxu0 0
    %1533 = vmatmul.mubr.bf16.gmra.mxu0 %v1330
    %v1534 = vpop.f32.mrf.mxu0
    %v1535 = vadd.f32 %v1410, %v1534
    %v1536 = vpop.f32.mrf.mxu0
    %v1537 = vpop.f32.mrf.mxu0
    %v1538 = vadd.f32 %v1410, %v1537
    %v1539 = vpop.f32.mrf.mxu0
    %1540 = vmatprep.mubr.bf16.mxu0 0
    %1541 = vmatmul.mubr.bf16.gmra.mxu0 %v1331
    %v1542 = vpop.f32.mrf.mxu0
    %v1543 = vadd.f32 %v1410, %v1542
    %v1544 = vpop.f32.mrf.mxu0
    %v1545 = vpop.f32.mrf.mxu0
    %v1546 = vadd.f32 %v1410, %v1545
    %v1547 = vpop.f32.mrf.mxu0
    %1548 = vmatprep.mubr.bf16.mxu0 0
    %1549 = vmatmul.mubr.bf16.gmra.mxu0 %v1332
    %v1550 = vpop.f32.mrf.mxu0
    %v1551 = vadd.f32 %v1410, %v1550
    %v1552 = vpop.f32.mrf.mxu0
    %v1553 = vpop.f32.mrf.mxu0
    %v1554 = vadd.f32 %v1410, %v1553
    %v1555 = vpop.f32.mrf.mxu0
    %1556 = vmatprep.mubr.bf16.mxu0 0
    %1557 = vmatmul.mubr.bf16.gmra.mxu0 %v1333
    %v1558 = vpop.f32.mrf.mxu0
    %v1559 = vadd.f32 %v1410, %v1558
    %v1560 = vpop.f32.mrf.mxu0
    %v1561 = vpop.f32.mrf.mxu0
    %v1562 = vadd.f32 %v1410, %v1561
    %v1563 = vpop.f32.mrf.mxu0
    %1564 = vmatprep.mubr.bf16.mxu0 0
    %1565 = vmatmul.mubr.bf16.gmra.mxu0 %v1334
    %v1566 = vpop.f32.mrf.mxu0
    %v1567 = vadd.f32 %v1410, %v1566
    %v1568 = vpop.f32.mrf.mxu0
    %v1569 = vpop.f32.mrf.mxu0
    %v1570 = vadd.f32 %v1410, %v1569
    %v1571 = vpop.f32.mrf.mxu0
    %1572 = vmatprep.mubr.bf16.mxu0 0
    %1573 = vmatmul.mubr.bf16.gmra.mxu0 %v1335
    %v1574 = vpop.f32.mrf.mxu0
    %v1575 = vadd.f32 %v1410, %v1574
    %v1576 = vpop.f32.mrf.mxu0
    %v1577 = vpop.f32.mrf.mxu0
    %v1578 = vadd.f32 %v1410, %v1577
    %v1579 = vpop.f32.mrf.mxu0
    %1580 = vmatprep.mubr.bf16.mxu0 0
    %1581 = vmatmul.mubr.bf16.gmra.mxu0 %v1336
    %v1582 = vpop.f32.mrf.mxu0
    %v1583 = vadd.f32 %v1410, %v1582
    %v1584 = vpop.f32.mrf.mxu0
    %v1585 = vpop.f32.mrf.mxu0
    %v1586 = vadd.f32 %v1410, %v1585
    %v1587 = vpop.f32.mrf.mxu0
    %1588 = vmatprep.mubr.bf16.mxu0 0
    %1589 = vmatmul.mubr.bf16.gmra.mxu0 %v1337
    %v1590 = vpop.f32.mrf.mxu0
    %v1591 = vadd.f32 %v1410, %v1590
    %v1592 = vpop.f32.mrf.mxu0
    %v1593 = vpop.f32.mrf.mxu0
    %v1594 = vadd.f32 %v1410, %v1593
    %v1595 = vpop.f32.mrf.mxu0
    %1596 = vmatprep.mubr.bf16.mxu0 0
    %1597 = vmatmul.mubr.bf16.gmra.mxu0 %v1338
    %v1598 = vpop.f32.mrf.mxu0
    %v1599 = vadd.f32 %v1410, %v1598
    %v1600 = vpop.f32.mrf.mxu0
    %v1601 = vpop.f32.mrf.mxu0
    %v1602 = vadd.f32 %v1410, %v1601
    %v1603 = vpop.f32.mrf.mxu0
    %1604 = vmatprep.mubr.bf16.mxu0 0
    %1605 = vmatmul.mubr.bf16.gmra.mxu0 %v1339
    %v1606 = vpop.f32.mrf.mxu0
    %v1607 = vadd.f32 %v1410, %v1606
    %v1608 = vpop.f32.mrf.mxu0
    %v1609 = vpop.f32.mrf.mxu0
    %v1610 = vadd.f32 %v1410, %v1609
    %v1611 = vpop.f32.mrf.mxu0
    %1612 = vmatprep.mubr.bf16.mxu0 0
    %1613 = vmatmul.mubr.bf16.gmra.mxu0 %v1340
    %v1614 = vpop.f32.mrf.mxu0
    %v1615 = vadd.f32 %v1410, %v1614
    %v1616 = vpop.f32.mrf.mxu0
    %v1617 = vpop.f32.mrf.mxu0
    %v1618 = vadd.f32 %v1410, %v1617
    %v1619 = vpop.f32.mrf.mxu0
    %1620 = vmatprep.mubr.bf16.mxu0 0
    %1621 = vmatmul.mubr.bf16.gmra.mxu0 %v1341
    %v1622 = vpop.f32.mrf.mxu0
    %v1623 = vadd.f32 %v1410, %v1622
    %v1624 = vpop.f32.mrf.mxu0
    %v1625 = vpop.f32.mrf.mxu0
    %v1626 = vadd.f32 %v1410, %v1625
    %v1627 = vpop.f32.mrf.mxu0
    %1628 = vmatprep.mubr.bf16.mxu0 0
    %1629 = vmatmul.mubr.bf16.gmra.mxu0 %v1342
    %v1630 = vpop.f32.mrf.mxu0
    %v1631 = vadd.f32 %v1410, %v1630
    %v1632 = vpop.f32.mrf.mxu0
    %v1633 = vpop.f32.mrf.mxu0
    %v1634 = vadd.f32 %v1410, %v1633
    %v1635 = vpop.f32.mrf.mxu0
    %1636 = vmatprep.mubr.bf16.mxu0 0
    %1637 = vmatmul.mubr.bf16.gmra.mxu0 %v1343
    %v1638 = vpop.f32.mrf.mxu0
    %v1639 = vadd.f32 %v1410, %v1638
    %v1640 = vpop.f32.mrf.mxu0
    %v1641 = vpop.f32.mrf.mxu0
    %v1642 = vadd.f32 %v1410, %v1641
    %v1643 = vpop.f32.mrf.mxu0
    %1644 = vmatprep.mubr.bf16.mxu0 0
    %1645 = vmatmul.mubr.bf16.gmra.mxu0 %v1344
    %v1646 = vpop.f32.mrf.mxu0
    %v1647 = vadd.f32 %v1410, %v1646
    %v1648 = vpop.f32.mrf.mxu0
    %v1649 = vpop.f32.mrf.mxu0
    %v1650 = vadd.f32 %v1410, %v1649
    %v1651 = vpop.f32.mrf.mxu0
    %1652 = vmatprep.mubr.bf16.mxu0 0
    %1653 = vmatmul.mubr.bf16.gmra.mxu0 %v1345
    %v1654 = vpop.f32.mrf.mxu0
    %v1655 = vadd.f32 %v1410, %v1654
    %v1656 = vpop.f32.mrf.mxu0
    %v1657 = vpop.f32.mrf.mxu0
    %v1658 = vadd.f32 %v1410, %v1657
    %v1659 = vpop.f32.mrf.mxu0
    %1660 = vmatprep.mubr.bf16.mxu0 0
    %1661 = vmatmul.mubr.bf16.gmra.mxu0 %v1346
    %v1662 = vpop.f32.mrf.mxu0
    %v1663 = vadd.f32 %v1410, %v1662
    %v1664 = vpop.f32.mrf.mxu0
    %v1665 = vpop.f32.mrf.mxu0
    %v1666 = vadd.f32 %v1410, %v1665
    %v1667 = vpop.f32.mrf.mxu0
    %1668 = vmatprep.mubr.bf16.mxu0 0
    %1669 = vmatmul.mubr.bf16.gmra.mxu0 %v1347
    %v1670 = vpop.f32.mrf.mxu0
    %v1671 = vadd.f32 %v1410, %v1670
    %v1672 = vpop.f32.mrf.mxu0
    %v1673 = vpop.f32.mrf.mxu0
    %v1674 = vadd.f32 %v1410, %v1673
    %v1675 = vpop.f32.mrf.mxu0
    %1676 = vmatprep.mubr.bf16.mxu0 0
    %1677 = vmatmul.mubr.bf16.gmra.mxu0 %v1348
    %v1678 = vpop.f32.mrf.mxu0
    %v1679 = vadd.f32 %v1410, %v1678
    %v1680 = vpop.f32.mrf.mxu0
    %v1681 = vpop.f32.mrf.mxu0
    %v1682 = vadd.f32 %v1410, %v1681
    %v1683 = vpop.f32.mrf.mxu0
    %1684 = vmatprep.mubr.bf16.mxu0 0
    %1685 = vmatmul.mubr.bf16.gmra.mxu0 %v1349
    %v1686 = vpop.f32.mrf.mxu0
    %v1687 = vadd.f32 %v1410, %v1686
    %v1688 = vpop.f32.mrf.mxu0
    %v1689 = vpop.f32.mrf.mxu0
    %v1690 = vadd.f32 %v1410, %v1689
    %v1691 = vpop.f32.mrf.mxu0
    %1692 = vmatprep.mubr.bf16.mxu0 0
    %1693 = vmatmul.mubr.bf16.gmra.mxu0 %v1350
    %v1694 = vpop.f32.mrf.mxu0
    %v1695 = vadd.f32 %v1410, %v1694
    %v1696 = vpop.f32.mrf.mxu0
    %v1697 = vpop.f32.mrf.mxu0
    %v1698 = vadd.f32 %v1410, %v1697
    %v1699 = vpop.f32.mrf.mxu0
    %1700 = vmatprep.mubr.bf16.mxu0 0
    %1701 = vmatmul.mubr.bf16.gmra.mxu0 %v1351
    %v1702 = vpop.f32.mrf.mxu0
    %v1703 = vadd.f32 %v1410, %v1702
    %v1704 = vpop.f32.mrf.mxu0
    %v1705 = vpop.f32.mrf.mxu0
    %v1706 = vadd.f32 %v1410, %v1705
    %v1707 = vpop.f32.mrf.mxu0
    %1708 = vmatprep.mubr.bf16.mxu0 0
    %1709 = vmatmul.mubr.bf16.gmra.mxu0 %v1352
    %v1710 = vpop.f32.mrf.mxu0
    %v1711 = vadd.f32 %v1410, %v1710
    %v1712 = vpop.f32.mrf.mxu0
    %v1713 = vpop.f32.mrf.mxu0
    %v1714 = vadd.f32 %v1410, %v1713
    %v1715 = vpop.f32.mrf.mxu0
    %1716 = vmatprep.mubr.bf16.mxu0 0
    %1717 = vmatmul.mubr.bf16.gmra.mxu0 %v1353
    %v1718 = vpop.f32.mrf.mxu0
    %v1719 = vadd.f32 %v1410, %v1718
    %v1720 = vpop.f32.mrf.mxu0
    %v1721 = vpop.f32.mrf.mxu0
    %v1722 = vadd.f32 %v1410, %v1721
    %v1723 = vpop.f32.mrf.mxu0
    %1724 = vmatprep.mubr.bf16.mxu0 0
    %1725 = vmatmul.mubr.bf16.gmra.mxu0 %v1354
    %v1726 = vpop.f32.mrf.mxu0
    %v1727 = vadd.f32 %v1410, %v1726
    %v1728 = vpop.f32.mrf.mxu0
    %v1729 = vpop.f32.mrf.mxu0
    %v1730 = vadd.f32 %v1410, %v1729
    %v1731 = vpop.f32.mrf.mxu0
    %1732 = vmatprep.mubr.bf16.mxu0 0
    %1733 = vmatmul.mubr.bf16.gmra.mxu0 %v1355
    %v1734 = vpop.f32.mrf.mxu0
    %v1735 = vadd.f32 %v1410, %v1734
    %v1736 = vpop.f32.mrf.mxu0
    %v1737 = vpop.f32.mrf.mxu0
    %v1738 = vadd.f32 %v1410, %v1737
    %v1739 = vpop.f32.mrf.mxu0
    %1740 = vmatprep.mubr.bf16.mxu0 0
    %1741 = vmatmul.mubr.bf16.gmra.mxu0 %v1356
    %v1742 = vpop.f32.mrf.mxu0
    %v1743 = vadd.f32 %v1410, %v1742
    %v1744 = vpop.f32.mrf.mxu0
    %v1745 = vpop.f32.mrf.mxu0
    %v1746 = vadd.f32 %v1410, %v1745
    %v1747 = vpop.f32.mrf.mxu0
    %1748 = vmatprep.mubr.bf16.mxu0 0
    %1749 = vmatmul.mubr.bf16.gmra.mxu0 %v1357
    %v1750 = vpop.f32.mrf.mxu0
    %v1751 = vadd.f32 %v1410, %v1750
    %v1752 = vpop.f32.mrf.mxu0
    %v1753 = vpop.f32.mrf.mxu0
    %v1754 = vadd.f32 %v1410, %v1753
    %v1755 = vpop.f32.mrf.mxu0
    %1756 = vmatprep.mubr.bf16.mxu0 0
    %1757 = vmatmul.mubr.bf16.gmra.mxu0 %v1358
    %v1758 = vpop.f32.mrf.mxu0
    %v1759 = vadd.f32 %v1410, %v1758
    %v1760 = vpop.f32.mrf.mxu0
    %v1761 = vpop.f32.mrf.mxu0
    %v1762 = vadd.f32 %v1410, %v1761
    %v1763 = vpop.f32.mrf.mxu0
    %1764 = vmatprep.mubr.bf16.mxu0 0
    %1765 = vmatmul.mubr.bf16.gmra.mxu0 %v1359
    %v1766 = vpop.f32.mrf.mxu0
    %v1767 = vadd.f32 %v1410, %v1766
    %v1768 = vpop.f32.mrf.mxu0
    %v1769 = vpop.f32.mrf.mxu0
    %v1770 = vadd.f32 %v1410, %v1769
    %v1771 = vpop.f32.mrf.mxu0
    %1772 = vmatprep.mubr.bf16.mxu0 0
    %1773 = vmatmul.mubr.bf16.gmra.mxu0 %v1360
    %v1774 = vpop.f32.mrf.mxu0
    %v1775 = vadd.f32 %v1410, %v1774
    %v1776 = vpop.f32.mrf.mxu0
    %v1777 = vpop.f32.mrf.mxu0
    %v1778 = vadd.f32 %v1410, %v1777
    %v1779 = vpop.f32.mrf.mxu0
    %1780 = vmatprep.mubr.bf16.mxu0 0
    %1781 = vmatmul.mubr.bf16.gmra.mxu0 %v1361
    %v1782 = vpop.f32.mrf.mxu0
    %v1783 = vadd.f32 %v1410, %v1782
    %v1784 = vpop.f32.mrf.mxu0
    %v1785 = vpop.f32.mrf.mxu0
    %v1786 = vadd.f32 %v1410, %v1785
    %v1787 = vpop.f32.mrf.mxu0
    %1788 = vmatprep.mubr.bf16.mxu0 0
    %1789 = vmatmul.mubr.bf16.gmra.mxu0 %v1362
    %v1790 = vpop.f32.mrf.mxu0
    %v1791 = vadd.f32 %v1410, %v1790
    %v1792 = vpop.f32.mrf.mxu0
    %v1793 = vpop.f32.mrf.mxu0
    %v1794 = vadd.f32 %v1410, %v1793
    %v1795 = vpop.f32.mrf.mxu0
    %1796 = vmatprep.mubr.bf16.mxu0 0
    %1797 = vmatmul.mubr.bf16.gmra.mxu0 %v1363
    %v1798 = vpop.f32.mrf.mxu0
    %v1799 = vadd.f32 %v1410, %v1798
    %v1800 = vpop.f32.mrf.mxu0
    %v1801 = vpop.f32.mrf.mxu0
    %v1802 = vadd.f32 %v1410, %v1801
    %v1803 = vpop.f32.mrf.mxu0
    %1804 = vmatprep.mubr.bf16.mxu0 0
    %1805 = vmatmul.mubr.bf16.gmra.mxu0 %v1364
    %v1806 = vpop.f32.mrf.mxu0
    %v1807 = vadd.f32 %v1410, %v1806
    %v1808 = vpop.f32.mrf.mxu0
    %v1809 = vpop.f32.mrf.mxu0
    %v1810 = vadd.f32 %v1410, %v1809
    %v1811 = vpop.f32.mrf.mxu0
    %1812 = vmatprep.mubr.bf16.mxu0 0
    %1813 = vmatmul.mubr.bf16.gmra.mxu0 %v1365
    %v1814 = vpop.f32.mrf.mxu0
    %v1815 = vadd.f32 %v1410, %v1814
    %v1816 = vpop.f32.mrf.mxu0
    %v1817 = vpop.f32.mrf.mxu0
    %v1818 = vadd.f32 %v1410, %v1817
    %v1819 = vpop.f32.mrf.mxu0
    %1820 = vmatprep.mubr.bf16.mxu0 0
    %1821 = vmatmul.mubr.bf16.gmra.mxu0 %v1366
    %v1822 = vpop.f32.mrf.mxu0
    %v1823 = vadd.f32 %v1410, %v1822
    %v1824 = vpop.f32.mrf.mxu0
    %v1825 = vpop.f32.mrf.mxu0
    %v1826 = vadd.f32 %v1410, %v1825
    %v1827 = vpop.f32.mrf.mxu0
    %1828 = vmatprep.mubr.bf16.mxu0 0
    %1829 = vmatmul.mubr.bf16.gmra.mxu0 %v1367
    %v1830 = vpop.f32.mrf.mxu0
    %v1831 = vadd.f32 %v1410, %v1830
    %v1832 = vpop.f32.mrf.mxu0
    %v1833 = vpop.f32.mrf.mxu0
    %v1834 = vadd.f32 %v1410, %v1833
    %v1835 = vpop.f32.mrf.mxu0
    %1836 = vmatprep.mubr.bf16.mxu0 0
    %1837 = vmatmul.mubr.bf16.gmra.mxu0 %v1368
    %v1838 = vpop.f32.mrf.mxu0
    %v1839 = vadd.f32 %v1410, %v1838
    %v1840 = vpop.f32.mrf.mxu0
    %v1841 = vpop.f32.mrf.mxu0
    %v1842 = vadd.f32 %v1410, %v1841
    %v1843 = vpop.f32.mrf.mxu0
    %1844 = vmatprep.mubr.bf16.mxu0 0
    %1845 = vmatmul.mubr.bf16.gmra.mxu0 %v1369
    %v1846 = vpop.f32.mrf.mxu0
    %v1847 = vadd.f32 %v1410, %v1846
    %v1848 = vpop.f32.mrf.mxu0
    %v1849 = vpop.f32.mrf.mxu0
    %v1850 = vadd.f32 %v1410, %v1849
    %v1851 = vpop.f32.mrf.mxu0
    %1852 = vmatprep.mubr.bf16.mxu0 0
    %1853 = vmatmul.mubr.bf16.gmra.mxu0 %v1370
    %v1854 = vpop.f32.mrf.mxu0
    %v1855 = vadd.f32 %v1410, %v1854
    %v1856 = vpop.f32.mrf.mxu0
    %v1857 = vpop.f32.mrf.mxu0
    %v1858 = vadd.f32 %v1410, %v1857
    %v1859 = vpop.f32.mrf.mxu0
    %1860 = vmatprep.mubr.bf16.mxu0 0
    %1861 = vmatmul.mubr.bf16.gmra.mxu0 %v1371
    %v1862 = vpop.f32.mrf.mxu0
    %v1863 = vadd.f32 %v1410, %v1862
    %v1864 = vpop.f32.mrf.mxu0
    %v1865 = vpop.f32.mrf.mxu0
    %v1866 = vadd.f32 %v1410, %v1865
    %v1867 = vpop.f32.mrf.mxu0
    %1868 = vmatprep.mubr.bf16.mxu0 0
    %1869 = vmatmul.mubr.bf16.gmra.mxu0 %v1372
    %v1870 = vpop.f32.mrf.mxu0
    %v1871 = vadd.f32 %v1410, %v1870
    %v1872 = vpop.f32.mrf.mxu0
    %v1873 = vpop.f32.mrf.mxu0
    %v1874 = vadd.f32 %v1410, %v1873
    %v1875 = vpop.f32.mrf.mxu0
    %1876 = vmatprep.mubr.bf16.mxu0 0
    %1877 = vmatmul.mubr.bf16.gmra.mxu0 %v1373
    %v1878 = vpop.f32.mrf.mxu0
    %v1879 = vadd.f32 %v1410, %v1878
    %v1880 = vpop.f32.mrf.mxu0
    %v1881 = vpop.f32.mrf.mxu0
    %v1882 = vadd.f32 %v1410, %v1881
    %v1883 = vpop.f32.mrf.mxu0
    %1884 = vmatprep.mubr.bf16.mxu0 0
    %1885 = vmatmul.mubr.bf16.gmra.mxu0 %v1374
    %v1886 = vpop.f32.mrf.mxu0
    %v1887 = vadd.f32 %v1410, %v1886
    %v1888 = vpop.f32.mrf.mxu0
    %v1889 = vpop.f32.mrf.mxu0
    %v1890 = vadd.f32 %v1410, %v1889
    %v1891 = vpop.f32.mrf.mxu0
    %1892 = vmatprep.mubr.bf16.mxu0 0
    %1893 = vmatmul.mubr.bf16.gmra.mxu0 %v1375
    %v1894 = vpop.f32.mrf.mxu0
    %v1895 = vadd.f32 %v1410, %v1894
    %v1896 = vpop.f32.mrf.mxu0
    %v1897 = vpop.f32.mrf.mxu0
    %v1898 = vadd.f32 %v1410, %v1897
    %v1899 = vpop.f32.mrf.mxu0
    %1900 = vmatprep.mubr.bf16.mxu0 0
    %1901 = vmatmul.mubr.bf16.gmra.mxu0 %v1376
    %v1902 = vpop.f32.mrf.mxu0
    %v1903 = vadd.f32 %v1410, %v1902
    %v1904 = vpop.f32.mrf.mxu0
    %v1905 = vpop.f32.mrf.mxu0
    %v1906 = vadd.f32 %v1410, %v1905
    %v1907 = vpop.f32.mrf.mxu0
    %1908 = vmatprep.mubr.bf16.mxu0 0
    %1909 = vmatmul.mubr.bf16.gmra.mxu0 %v1377
    %v1910 = vpop.f32.mrf.mxu0
    %v1911 = vadd.f32 %v1410, %v1910
    %v1912 = vpop.f32.mrf.mxu0
    %v1913 = vpop.f32.mrf.mxu0
    %v1914 = vadd.f32 %v1410, %v1913
    %v1915 = vpop.f32.mrf.mxu0
    %1916 = vmatprep.mubr.bf16.mxu0 0
    %1917 = vmatmul.mubr.bf16.gmra.mxu0 %v1378
    %v1918 = vpop.f32.mrf.mxu0
    %v1919 = vadd.f32 %v1410, %v1918
    %v1920 = vpop.f32.mrf.mxu0
    %v1921 = vpop.f32.mrf.mxu0
    %v1922 = vadd.f32 %v1410, %v1921
    %v1923 = vpop.f32.mrf.mxu0
    %1924 = vmatprep.mubr.bf16.mxu0 0
    %1925 = vmatmul.mubr.bf16.gmra.mxu0 %v1379
    %v1926 = vpop.f32.mrf.mxu0
    %v1927 = vadd.f32 %v1410, %v1926
    %v1928 = vpop.f32.mrf.mxu0
    %v1929 = vpop.f32.mrf.mxu0
    %v1930 = vadd.f32 %v1410, %v1929
    %v1931 = vpop.f32.mrf.mxu0
    %1932 = vmatprep.mubr.bf16.mxu0 0
    %1933 = vmatmul.mubr.bf16.gmra.mxu0 %v1380
    %v1934 = vpop.f32.mrf.mxu0
    %v1935 = vadd.f32 %v1410, %v1934
    %v1936 = vpop.f32.mrf.mxu0
    %v1937 = vpop.f32.mrf.mxu0
    %v1938 = vadd.f32 %v1410, %v1937
    %v1939 = vpop.f32.mrf.mxu0
    %1940 = vmatprep.mubr.bf16.mxu0 0
    %1941 = vmatmul.mubr.bf16.gmra.mxu0 %v1381
    %v1942 = vpop.f32.mrf.mxu0
    %v1943 = vadd.f32 %v1410, %v1942
    %v1944 = vpop.f32.mrf.mxu0
    %v1945 = vpop.f32.mrf.mxu0
    %v1946 = vadd.f32 %v1410, %v1945
    %v1947 = vpop.f32.mrf.mxu0
    %1948 = vmatprep.mubr.bf16.mxu0 0
    %1949 = vmatmul.mubr.bf16.gmra.mxu0 %v1382
    %v1950 = vpop.f32.mrf.mxu0
    %v1951 = vadd.f32 %v1410, %v1950
    %v1952 = vpop.f32.mrf.mxu0
    %v1953 = vpop.f32.mrf.mxu0
    %v1954 = vadd.f32 %v1410, %v1953
    %v1955 = vpop.f32.mrf.mxu0
    %1956 = vmatprep.mubr.bf16.mxu0 0
    %1957 = vmatmul.mubr.bf16.gmra.mxu0 %v1383
    %v1958 = vpop.f32.mrf.mxu0
    %v1959 = vadd.f32 %v1410, %v1958
    %v1960 = vpop.f32.mrf.mxu0
    %v1961 = vpop.f32.mrf.mxu0
    %v1962 = vadd.f32 %v1410, %v1961
    %v1963 = vpop.f32.mrf.mxu0
    %1964 = vmatprep.mubr.bf16.mxu0 0
    %1965 = vmatmul.mubr.bf16.gmra.mxu0 %v1384
    %v1966 = vpop.f32.mrf.mxu0
    %v1967 = vadd.f32 %v1410, %v1966
    %v1968 = vpop.f32.mrf.mxu0
    %v1969 = vpop.f32.mrf.mxu0
    %v1970 = vadd.f32 %v1410, %v1969
    %v1971 = vpop.f32.mrf.mxu0
    %1972 = vmatprep.mubr.bf16.mxu0 0
    %1973 = vmatmul.mubr.bf16.gmra.mxu0 %v1385
    %v1974 = vpop.f32.mrf.mxu0
    %v1975 = vadd.f32 %v1410, %v1974
    %v1976 = vpop.f32.mrf.mxu0
    %v1977 = vpop.f32.mrf.mxu0
    %v1978 = vadd.f32 %v1410, %v1977
    %v1979 = vpop.f32.mrf.mxu0
    %1980 = vmatprep.mubr.bf16.mxu0 0
    %1981 = vmatmul.mubr.bf16.gmra.mxu0 %v1386
    %v1982 = vpop.f32.mrf.mxu0
    %v1983 = vadd.f32 %v1410, %v1982
    %v1984 = vpop.f32.mrf.mxu0
    %v1985 = vpop.f32.mrf.mxu0
    %v1986 = vadd.f32 %v1410, %v1985
    %v1987 = vpop.f32.mrf.mxu0
    %1988 = vmatprep.mubr.bf16.mxu0 0
    %1989 = vmatmul.mubr.bf16.gmra.mxu0 %v1387
    %v1990 = vpop.f32.mrf.mxu0
    %v1991 = vadd.f32 %v1410, %v1990
    %v1992 = vpop.f32.mrf.mxu0
    %v1993 = vpop.f32.mrf.mxu0
    %v1994 = vadd.f32 %v1410, %v1993
    %v1995 = vpop.f32.mrf.mxu0
    %1996 = vmatprep.mubr.bf16.mxu0 0
    %1997 = vmatmul.mubr.bf16.gmra.mxu0 %v1388
    %v1998 = vpop.f32.mrf.mxu0
    %v1999 = vadd.f32 %v1410, %v1998
    %v2000 = vpop.f32.mrf.mxu0
    %v2001 = vpop.f32.mrf.mxu0
    %v2002 = vadd.f32 %v1410, %v2001
    %v2003 = vpop.f32.mrf.mxu0
    %2004 = vdwg.mxu0
    %v2005 = vmax.f32 %v1495, 0.0
    %v2006 = vmax.f32 %v1498, 0.0
    %v2007 = vmax.f32 %v1503, 0.0
    %v2008 = vmax.f32 %v1506, 0.0
    %v2009 = vmax.f32 %v1511, 0.0
    %v2010 = vmax.f32 %v1514, 0.0
    %v2011 = vmax.f32 %v1519, 0.0
    %v2012 = vmax.f32 %v1522, 0.0
    %v2013 = vmax.f32 %v1527, 0.0
    %v2014 = vmax.f32 %v1530, 0.0
    %v2015 = vmax.f32 %v1535, 0.0
    %v2016 = vmax.f32 %v1538, 0.0
    %v2017 = vmax.f32 %v1543, 0.0
    %v2018 = vmax.f32 %v1546, 0.0
    %v2019 = vmax.f32 %v1551, 0.0
    %v2020 = vmax.f32 %v1554, 0.0
    %v2021 = vmax.f32 %v1559, 0.0
    %v2022 = vmax.f32 %v1562, 0.0
    %v2023 = vmax.f32 %v1567, 0.0
    %v2024 = vmax.f32 %v1570, 0.0
    %v2025 = vmax.f32 %v1575, 0.0
    %v2026 = vmax.f32 %v1578, 0.0
    %v2027 = vmax.f32 %v1583, 0.0
    %v2028 = vmax.f32 %v1586, 0.0
    %v2029 = vmax.f32 %v1591, 0.0
    %v2030 = vmax.f32 %v1594, 0.0
    %v2031 = vmax.f32 %v1599, 0.0
    %v2032 = vmax.f32 %v1602, 0.0
    %v2033 = vmax.f32 %v1607, 0.0
    %v2034 = vmax.f32 %v1610, 0.0
    %v2035 = vmax.f32 %v1615, 0.0
    %v2036 = vmax.f32 %v1618, 0.0
    %v2037 = vmax.f32 %v1623, 0.0
    %v2038 = vmax.f32 %v1626, 0.0
    %v2039 = vmax.f32 %v1631, 0.0
    %v2040 = vmax.f32 %v1634, 0.0
    %v2041 = vmax.f32 %v1639, 0.0
    %v2042 = vmax.f32 %v1642, 0.0
    %v2043 = vmax.f32 %v1647, 0.0
    %v2044 = vmax.f32 %v1650, 0.0
    %v2045 = vmax.f32 %v1655, 0.0
    %v2046 = vmax.f32 %v1658, 0.0
    %v2047 = vmax.f32 %v1663, 0.0
    %v2048 = vmax.f32 %v1666, 0.0
    %v2049 = vmax.f32 %v1671, 0.0
    %v2050 = vmax.f32 %v1674, 0.0
    %v2051 = vmax.f32 %v1679, 0.0
    %v2052 = vmax.f32 %v1682, 0.0
    %v2053 = vmax.f32 %v1687, 0.0
    %v2054 = vmax.f32 %v1690, 0.0
    %v2055 = vmax.f32 %v1695, 0.0
    %v2056 = vmax.f32 %v1698, 0.0
    %v2057 = vmax.f32 %v1703, 0.0
    %v2058 = vmax.f32 %v1706, 0.0
    %v2059 = vmax.f32 %v1711, 0.0
    %v2060 = vmax.f32 %v1714, 0.0
    %v2061 = vmax.f32 %v1719, 0.0
    %v2062 = vmax.f32 %v1722, 0.0
    %v2063 = vmax.f32 %v1727, 0.0
    %v2064 = vmax.f32 %v1730, 0.0
    %v2065 = vmax.f32 %v1735, 0.0
    %v2066 = vmax.f32 %v1738, 0.0
    %v2067 = vmax.f32 %v1743, 0.0
    %v2068 = vmax.f32 %v1746, 0.0
    %v2069 = vmax.f32 %v1751, 0.0
    %v2070 = vmax.f32 %v1754, 0.0
    %v2071 = vmax.f32 %v1759, 0.0
    %v2072 = vmax.f32 %v1762, 0.0
    %v2073 = vmax.f32 %v1767, 0.0
    %v2074 = vmax.f32 %v1770, 0.0
    %v2075 = vmax.f32 %v1775, 0.0
    %v2076 = vmax.f32 %v1778, 0.0
    %v2077 = vmax.f32 %v1783, 0.0
    %v2078 = vmax.f32 %v1786, 0.0
    %v2079 = vmax.f32 %v1791, 0.0
    %v2080 = vmax.f32 %v1794, 0.0
    %v2081 = vmax.f32 %v1799, 0.0
    %v2082 = vmax.f32 %v1802, 0.0
    %v2083 = vmax.f32 %v1807, 0.0
    %v2084 = vmax.f32 %v1810, 0.0
    %v2085 = vmax.f32 %v1815, 0.0
    %v2086 = vmax.f32 %v1818, 0.0
    %v2087 = vmax.f32 %v1823, 0.0
    %v2088 = vmax.f32 %v1826, 0.0
    %v2089 = vmax.f32 %v1831, 0.0
    %v2090 = vmax.f32 %v1834, 0.0
    %v2091 = vmax.f32 %v1839, 0.0
    %v2092 = vmax.f32 %v1842, 0.0
    %v2093 = vmax.f32 %v1847, 0.0
    %v2094 = vmax.f32 %v1850, 0.0
    %v2095 = vmax.f32 %v1855, 0.0
    %v2096 = vmax.f32 %v1858, 0.0
    %v2097 = vmax.f32 %v1863, 0.0
    %v2098 = vmax.f32 %v1866, 0.0
    %v2099 = vmax.f32 %v1871, 0.0
    %v2100 = vmax.f32 %v1874, 0.0
    %v2101 = vmax.f32 %v1879, 0.0
    %v2102 = vmax.f32 %v1882, 0.0
    %v2103 = vmax.f32 %v1887, 0.0
    %v2104 = vmax.f32 %v1890, 0.0
    %v2105 = vmax.f32 %v1895, 0.0
    %v2106 = vmax.f32 %v1898, 0.0
    %v2107 = vmax.f32 %v1903, 0.0
    %v2108 = vmax.f32 %v1906, 0.0
    %v2109 = vmax.f32 %v1911, 0.0
    %v2110 = vmax.f32 %v1914, 0.0
    %v2111 = vmax.f32 %v1919, 0.0
    %v2112 = vmax.f32 %v1922, 0.0
    %v2113 = vmax.f32 %v1927, 0.0
    %v2114 = vmax.f32 %v1930, 0.0
    %v2115 = vmax.f32 %v1935, 0.0
    %v2116 = vmax.f32 %v1938, 0.0
    %v2117 = vmax.f32 %v1943, 0.0
    %v2118 = vmax.f32 %v1946, 0.0
    %v2119 = vmax.f32 %v1951, 0.0
    %v2120 = vmax.f32 %v1954, 0.0
    %v2121 = vmax.f32 %v1959, 0.0
    %v2122 = vmax.f32 %v1962, 0.0
    %v2123 = vmax.f32 %v1967, 0.0
    %v2124 = vmax.f32 %v1970, 0.0
    %v2125 = vmax.f32 %v1975, 0.0
    %v2126 = vmax.f32 %v1978, 0.0
    %v2127 = vmax.f32 %v1983, 0.0
    %v2128 = vmax.f32 %v1986, 0.0
    %v2129 = vmax.f32 %v1991, 0.0
    %v2130 = vmax.f32 %v1994, 0.0
    %v2131 = vmax.f32 %v1999, 0.0
    %v2132 = vmax.f32 %v2002, 0.0
    %v2133 = vld [vmem:[%s5] sm:$0x1]
    %v2135 = vlaneseq
    %v2136 = vshrl.u32 %v2135, 7
    %v2137 = vsub.s32 0, %v2136
    %v2138 = vrot.slane %v2133, %v2137
    %v2140 = vmul.f32 %v2005, %v2138
    %v2141 = vmul.f32 %v2006, %v2138
    %v2142 = vmul.f32 %v2007, %v2138
    %v2143 = vmul.f32 %v2008, %v2138
    %v2144 = vmul.f32 %v2009, %v2138
    %v2145 = vmul.f32 %v2010, %v2138
    %v2146 = vmul.f32 %v2011, %v2138
    %v2147 = vmul.f32 %v2012, %v2138
    %v2148 = vmul.f32 %v2013, %v2138
    %v2149 = vmul.f32 %v2014, %v2138
    %v2150 = vmul.f32 %v2015, %v2138
    %v2151 = vmul.f32 %v2016, %v2138
    %v2152 = vmul.f32 %v2017, %v2138
    %v2153 = vmul.f32 %v2018, %v2138
    %v2154 = vmul.f32 %v2019, %v2138
    %v2155 = vmul.f32 %v2020, %v2138
    %v2156 = vmul.f32 %v2021, %v2138
    %v2157 = vmul.f32 %v2022, %v2138
    %v2158 = vmul.f32 %v2023, %v2138
    %v2159 = vmul.f32 %v2024, %v2138
    %v2160 = vmul.f32 %v2025, %v2138
    %v2161 = vmul.f32 %v2026, %v2138
    %v2162 = vmul.f32 %v2027, %v2138
    %v2163 = vmul.f32 %v2028, %v2138
    %v2164 = vmul.f32 %v2029, %v2138
    %v2165 = vmul.f32 %v2030, %v2138
    %v2166 = vmul.f32 %v2031, %v2138
    %v2167 = vmul.f32 %v2032, %v2138
    %v2168 = vmul.f32 %v2033, %v2138
    %v2169 = vmul.f32 %v2034, %v2138
    %v2170 = vmul.f32 %v2035, %v2138
    %v2171 = vmul.f32 %v2036, %v2138
    %v2172 = vmul.f32 %v2037, %v2138
    %v2173 = vmul.f32 %v2038, %v2138
    %v2174 = vmul.f32 %v2039, %v2138
    %v2175 = vmul.f32 %v2040, %v2138
    %v2176 = vmul.f32 %v2041, %v2138
    %v2177 = vmul.f32 %v2042, %v2138
    %v2178 = vmul.f32 %v2043, %v2138
    %v2179 = vmul.f32 %v2044, %v2138
    %v2180 = vmul.f32 %v2045, %v2138
    %v2181 = vmul.f32 %v2046, %v2138
    %v2182 = vmul.f32 %v2047, %v2138
    %v2183 = vmul.f32 %v2048, %v2138
    %v2184 = vmul.f32 %v2049, %v2138
    %v2185 = vmul.f32 %v2050, %v2138
    %v2186 = vmul.f32 %v2051, %v2138
    %v2187 = vmul.f32 %v2052, %v2138
    %v2188 = vmul.f32 %v2053, %v2138
    %v2189 = vmul.f32 %v2054, %v2138
    %v2190 = vmul.f32 %v2055, %v2138
    %v2191 = vmul.f32 %v2056, %v2138
    %v2192 = vmul.f32 %v2057, %v2138
    %v2193 = vmul.f32 %v2058, %v2138
    %v2194 = vmul.f32 %v2059, %v2138
    %v2195 = vmul.f32 %v2060, %v2138
    %v2196 = vmul.f32 %v2061, %v2138
    %v2197 = vmul.f32 %v2062, %v2138
    %v2198 = vmul.f32 %v2063, %v2138
    %v2199 = vmul.f32 %v2064, %v2138
    %v2200 = vmul.f32 %v2065, %v2138
    %v2201 = vmul.f32 %v2066, %v2138
    %v2202 = vmul.f32 %v2067, %v2138
    %v2203 = vmul.f32 %v2068, %v2138
    %v2204 = vmul.f32 %v2069, %v2138
    %v2205 = vmul.f32 %v2070, %v2138
    %v2206 = vmul.f32 %v2071, %v2138
    %v2207 = vmul.f32 %v2072, %v2138
    %v2208 = vmul.f32 %v2073, %v2138
    %v2209 = vmul.f32 %v2074, %v2138
    %v2210 = vmul.f32 %v2075, %v2138
    %v2211 = vmul.f32 %v2076, %v2138
    %v2212 = vmul.f32 %v2077, %v2138
    %v2213 = vmul.f32 %v2078, %v2138
    %v2214 = vmul.f32 %v2079, %v2138
    %v2215 = vmul.f32 %v2080, %v2138
    %v2216 = vmul.f32 %v2081, %v2138
    %v2217 = vmul.f32 %v2082, %v2138
    %v2218 = vmul.f32 %v2083, %v2138
    %v2219 = vmul.f32 %v2084, %v2138
    %v2220 = vmul.f32 %v2085, %v2138
    %v2221 = vmul.f32 %v2086, %v2138
    %v2222 = vmul.f32 %v2087, %v2138
    %v2223 = vmul.f32 %v2088, %v2138
    %v2224 = vmul.f32 %v2089, %v2138
    %v2225 = vmul.f32 %v2090, %v2138
    %v2226 = vmul.f32 %v2091, %v2138
    %v2227 = vmul.f32 %v2092, %v2138
    %v2228 = vmul.f32 %v2093, %v2138
    %v2229 = vmul.f32 %v2094, %v2138
    %v2230 = vmul.f32 %v2095, %v2138
    %v2231 = vmul.f32 %v2096, %v2138
    %v2232 = vmul.f32 %v2097, %v2138
    %v2233 = vmul.f32 %v2098, %v2138
    %v2234 = vmul.f32 %v2099, %v2138
    %v2235 = vmul.f32 %v2100, %v2138
    %v2236 = vmul.f32 %v2101, %v2138
    %v2237 = vmul.f32 %v2102, %v2138
    %v2238 = vmul.f32 %v2103, %v2138
    %v2239 = vmul.f32 %v2104, %v2138
    %v2240 = vmul.f32 %v2105, %v2138
    %v2241 = vmul.f32 %v2106, %v2138
    %v2242 = vmul.f32 %v2107, %v2138
    %v2243 = vmul.f32 %v2108, %v2138
    %v2244 = vmul.f32 %v2109, %v2138
    %v2245 = vmul.f32 %v2110, %v2138
    %v2246 = vmul.f32 %v2111, %v2138
    %v2247 = vmul.f32 %v2112, %v2138
    %v2248 = vmul.f32 %v2113, %v2138
    %v2249 = vmul.f32 %v2114, %v2138
    %v2250 = vmul.f32 %v2115, %v2138
    %v2251 = vmul.f32 %v2116, %v2138
    %v2252 = vmul.f32 %v2117, %v2138
    %v2253 = vmul.f32 %v2118, %v2138
    %v2254 = vmul.f32 %v2119, %v2138
    %v2255 = vmul.f32 %v2120, %v2138
    %v2256 = vmul.f32 %v2121, %v2138
    %v2257 = vmul.f32 %v2122, %v2138
    %v2258 = vmul.f32 %v2123, %v2138
    %v2259 = vmul.f32 %v2124, %v2138
    %v2260 = vmul.f32 %v2125, %v2138
    %v2261 = vmul.f32 %v2126, %v2138
    %v2262 = vmul.f32 %v2127, %v2138
    %v2263 = vmul.f32 %v2128, %v2138
    %v2264 = vmul.f32 %v2129, %v2138
    %v2265 = vmul.f32 %v2130, %v2138
    %v2266 = vmul.f32 %v2131, %v2138
    %v2267 = vmul.f32 %v2132, %v2138
    %v2268 = vld [vmem:[%s6] sm:$0x1]
    %v2270 = vlaneseq
    %v2271 = vshrl.u32 %v2270, 7
    %v2272 = vsub.s32 0, %v2271
    %v2273 = vrot.slane %v2268, %v2272
    %v2275 = vadd.f32 %v2140, %v2273
    %v2276 = vadd.f32 %v2141, %v2273
    %v2277 = vadd.f32 %v2142, %v2273
    %v2278 = vadd.f32 %v2143, %v2273
    %v2279 = vadd.f32 %v2144, %v2273
    %v2280 = vadd.f32 %v2145, %v2273
    %v2281 = vadd.f32 %v2146, %v2273
    %v2282 = vadd.f32 %v2147, %v2273
    %v2283 = vadd.f32 %v2148, %v2273
    %v2284 = vadd.f32 %v2149, %v2273
    %v2285 = vadd.f32 %v2150, %v2273
    %v2286 = vadd.f32 %v2151, %v2273
    %v2287 = vadd.f32 %v2152, %v2273
    %v2288 = vadd.f32 %v2153, %v2273
    %v2289 = vadd.f32 %v2154, %v2273
    %v2290 = vadd.f32 %v2155, %v2273
    %v2291 = vadd.f32 %v2156, %v2273
    %v2292 = vadd.f32 %v2157, %v2273
    %v2293 = vadd.f32 %v2158, %v2273
    %v2294 = vadd.f32 %v2159, %v2273
    %v2295 = vadd.f32 %v2160, %v2273
    %v2296 = vadd.f32 %v2161, %v2273
    %v2297 = vadd.f32 %v2162, %v2273
    %v2298 = vadd.f32 %v2163, %v2273
    %v2299 = vadd.f32 %v2164, %v2273
    %v2300 = vadd.f32 %v2165, %v2273
    %v2301 = vadd.f32 %v2166, %v2273
    %v2302 = vadd.f32 %v2167, %v2273
    %v2303 = vadd.f32 %v2168, %v2273
    %v2304 = vadd.f32 %v2169, %v2273
    %v2305 = vadd.f32 %v2170, %v2273
    %v2306 = vadd.f32 %v2171, %v2273
    %v2307 = vadd.f32 %v2172, %v2273
    %v2308 = vadd.f32 %v2173, %v2273
    %v2309 = vadd.f32 %v2174, %v2273
    %v2310 = vadd.f32 %v2175, %v2273
    %v2311 = vadd.f32 %v2176, %v2273
    %v2312 = vadd.f32 %v2177, %v2273
    %v2313 = vadd.f32 %v2178, %v2273
    %v2314 = vadd.f32 %v2179, %v2273
    %v2315 = vadd.f32 %v2180, %v2273
    %v2316 = vadd.f32 %v2181, %v2273
    %v2317 = vadd.f32 %v2182, %v2273
    %v2318 = vadd.f32 %v2183, %v2273
    %v2319 = vadd.f32 %v2184, %v2273
    %v2320 = vadd.f32 %v2185, %v2273
    %v2321 = vadd.f32 %v2186, %v2273
    %v2322 = vadd.f32 %v2187, %v2273
    %v2323 = vadd.f32 %v2188, %v2273
    %v2324 = vadd.f32 %v2189, %v2273
    %v2325 = vadd.f32 %v2190, %v2273
    %v2326 = vadd.f32 %v2191, %v2273
    %v2327 = vadd.f32 %v2192, %v2273
    %v2328 = vadd.f32 %v2193, %v2273
    %v2329 = vadd.f32 %v2194, %v2273
    %v2330 = vadd.f32 %v2195, %v2273
    %v2331 = vadd.f32 %v2196, %v2273
    %v2332 = vadd.f32 %v2197, %v2273
    %v2333 = vadd.f32 %v2198, %v2273
    %v2334 = vadd.f32 %v2199, %v2273
    %v2335 = vadd.f32 %v2200, %v2273
    %v2336 = vadd.f32 %v2201, %v2273
    %v2337 = vadd.f32 %v2202, %v2273
    %v2338 = vadd.f32 %v2203, %v2273
    %v2339 = vadd.f32 %v2204, %v2273
    %v2340 = vadd.f32 %v2205, %v2273
    %v2341 = vadd.f32 %v2206, %v2273
    %v2342 = vadd.f32 %v2207, %v2273
    %v2343 = vadd.f32 %v2208, %v2273
    %v2344 = vadd.f32 %v2209, %v2273
    %v2345 = vadd.f32 %v2210, %v2273
    %v2346 = vadd.f32 %v2211, %v2273
    %v2347 = vadd.f32 %v2212, %v2273
    %v2348 = vadd.f32 %v2213, %v2273
    %v2349 = vadd.f32 %v2214, %v2273
    %v2350 = vadd.f32 %v2215, %v2273
    %v2351 = vadd.f32 %v2216, %v2273
    %v2352 = vadd.f32 %v2217, %v2273
    %v2353 = vadd.f32 %v2218, %v2273
    %v2354 = vadd.f32 %v2219, %v2273
    %v2355 = vadd.f32 %v2220, %v2273
    %v2356 = vadd.f32 %v2221, %v2273
    %v2357 = vadd.f32 %v2222, %v2273
    %v2358 = vadd.f32 %v2223, %v2273
    %v2359 = vadd.f32 %v2224, %v2273
    %v2360 = vadd.f32 %v2225, %v2273
    %v2361 = vadd.f32 %v2226, %v2273
    %v2362 = vadd.f32 %v2227, %v2273
    %v2363 = vadd.f32 %v2228, %v2273
    %v2364 = vadd.f32 %v2229, %v2273
    %v2365 = vadd.f32 %v2230, %v2273
    %v2366 = vadd.f32 %v2231, %v2273
    %v2367 = vadd.f32 %v2232, %v2273
    %v2368 = vadd.f32 %v2233, %v2273
    %v2369 = vadd.f32 %v2234, %v2273
    %v2370 = vadd.f32 %v2235, %v2273
    %v2371 = vadd.f32 %v2236, %v2273
    %v2372 = vadd.f32 %v2237, %v2273
    %v2373 = vadd.f32 %v2238, %v2273
    %v2374 = vadd.f32 %v2239, %v2273
    %v2375 = vadd.f32 %v2240, %v2273
    %v2376 = vadd.f32 %v2241, %v2273
    %v2377 = vadd.f32 %v2242, %v2273
    %v2378 = vadd.f32 %v2243, %v2273
    %v2379 = vadd.f32 %v2244, %v2273
    %v2380 = vadd.f32 %v2245, %v2273
    %v2381 = vadd.f32 %v2246, %v2273
    %v2382 = vadd.f32 %v2247, %v2273
    %v2383 = vadd.f32 %v2248, %v2273
    %v2384 = vadd.f32 %v2249, %v2273
    %v2385 = vadd.f32 %v2250, %v2273
    %v2386 = vadd.f32 %v2251, %v2273
    %v2387 = vadd.f32 %v2252, %v2273
    %v2388 = vadd.f32 %v2253, %v2273
    %v2389 = vadd.f32 %v2254, %v2273
    %v2390 = vadd.f32 %v2255, %v2273
    %v2391 = vadd.f32 %v2256, %v2273
    %v2392 = vadd.f32 %v2257, %v2273
    %v2393 = vadd.f32 %v2258, %v2273
    %v2394 = vadd.f32 %v2259, %v2273
    %v2395 = vadd.f32 %v2260, %v2273
    %v2396 = vadd.f32 %v2261, %v2273
    %v2397 = vadd.f32 %v2262, %v2273
    %v2398 = vadd.f32 %v2263, %v2273
    %v2399 = vadd.f32 %v2264, %v2273
    %v2400 = vadd.f32 %v2265, %v2273
    %v2401 = vadd.f32 %v2266, %v2273
    %v2402 = vadd.f32 %v2267, %v2273
    %v2403 = vpack.c.bf16 %v2276, %v2275
    %v2404 = vpack.c.bf16 %v2278, %v2277
    %v2405 = vpack.c.bf16 %v2280, %v2279
    %v2406 = vpack.c.bf16 %v2282, %v2281
    %v2407 = vpack.c.bf16 %v2284, %v2283
    %v2408 = vpack.c.bf16 %v2286, %v2285
    %v2409 = vpack.c.bf16 %v2288, %v2287
    %v2410 = vpack.c.bf16 %v2290, %v2289
    %v2411 = vpack.c.bf16 %v2292, %v2291
    %v2412 = vpack.c.bf16 %v2294, %v2293
    %v2413 = vpack.c.bf16 %v2296, %v2295
    %v2414 = vpack.c.bf16 %v2298, %v2297
    %v2415 = vpack.c.bf16 %v2300, %v2299
    %v2416 = vpack.c.bf16 %v2302, %v2301
    %v2417 = vpack.c.bf16 %v2304, %v2303
    %v2418 = vpack.c.bf16 %v2306, %v2305
    %v2419 = vpack.c.bf16 %v2308, %v2307
    %v2420 = vpack.c.bf16 %v2310, %v2309
    %v2421 = vpack.c.bf16 %v2312, %v2311
    %v2422 = vpack.c.bf16 %v2314, %v2313
    %v2423 = vpack.c.bf16 %v2316, %v2315
    %v2424 = vpack.c.bf16 %v2318, %v2317
    %v2425 = vpack.c.bf16 %v2320, %v2319
    %v2426 = vpack.c.bf16 %v2322, %v2321
    %v2427 = vpack.c.bf16 %v2324, %v2323
    %v2428 = vpack.c.bf16 %v2326, %v2325
    %v2429 = vpack.c.bf16 %v2328, %v2327
    %v2430 = vpack.c.bf16 %v2330, %v2329
    %v2431 = vpack.c.bf16 %v2332, %v2331
    %v2432 = vpack.c.bf16 %v2334, %v2333
    %v2433 = vpack.c.bf16 %v2336, %v2335
    %v2434 = vpack.c.bf16 %v2338, %v2337
    %v2435 = vpack.c.bf16 %v2340, %v2339
    %v2436 = vpack.c.bf16 %v2342, %v2341
    %v2437 = vpack.c.bf16 %v2344, %v2343
    %v2438 = vpack.c.bf16 %v2346, %v2345
    %v2439 = vpack.c.bf16 %v2348, %v2347
    %v2440 = vpack.c.bf16 %v2350, %v2349
    %v2441 = vpack.c.bf16 %v2352, %v2351
    %v2442 = vpack.c.bf16 %v2354, %v2353
    %v2443 = vpack.c.bf16 %v2356, %v2355
    %v2444 = vpack.c.bf16 %v2358, %v2357
    %v2445 = vpack.c.bf16 %v2360, %v2359
    %v2446 = vpack.c.bf16 %v2362, %v2361
    %v2447 = vpack.c.bf16 %v2364, %v2363
    %v2448 = vpack.c.bf16 %v2366, %v2365
    %v2449 = vpack.c.bf16 %v2368, %v2367
    %v2450 = vpack.c.bf16 %v2370, %v2369
    %v2451 = vpack.c.bf16 %v2372, %v2371
    %v2452 = vpack.c.bf16 %v2374, %v2373
    %v2453 = vpack.c.bf16 %v2376, %v2375
    %v2454 = vpack.c.bf16 %v2378, %v2377
    %v2455 = vpack.c.bf16 %v2380, %v2379
    %v2456 = vpack.c.bf16 %v2382, %v2381
    %v2457 = vpack.c.bf16 %v2384, %v2383
    %v2458 = vpack.c.bf16 %v2386, %v2385
    %v2459 = vpack.c.bf16 %v2388, %v2387
    %v2460 = vpack.c.bf16 %v2390, %v2389
    %v2461 = vpack.c.bf16 %v2392, %v2391
    %v2462 = vpack.c.bf16 %v2394, %v2393
    %v2463 = vpack.c.bf16 %v2396, %v2395
    %v2464 = vpack.c.bf16 %v2398, %v2397
    %v2465 = vpack.c.bf16 %v2400, %v2399
    %v2466 = vpack.c.bf16 %v2402, %v2401
    %v2531 = vunpack.c.l.b16 %v2403
    %v2532 = vunpack.c.h.b16 %v2403
    %v2533 = vunpack.c.l.b16 %v2404
    %v2534 = vunpack.c.h.b16 %v2404
    %v2535 = vunpack.c.l.b16 %v2405
    %v2536 = vunpack.c.h.b16 %v2405
    %v2537 = vunpack.c.l.b16 %v2406
    %v2538 = vunpack.c.h.b16 %v2406
    %v2539 = vunpack.c.l.b16 %v2407
    %v2540 = vunpack.c.h.b16 %v2407
    %v2541 = vunpack.c.l.b16 %v2408
    %v2542 = vunpack.c.h.b16 %v2408
    %v2543 = vunpack.c.l.b16 %v2409
    %v2544 = vunpack.c.h.b16 %v2409
    %v2545 = vunpack.c.l.b16 %v2410
    %v2546 = vunpack.c.h.b16 %v2410
    %v2547 = vunpack.c.l.b16 %v2411
    %v2548 = vunpack.c.h.b16 %v2411
    %v2549 = vunpack.c.l.b16 %v2412
    %v2550 = vunpack.c.h.b16 %v2412
    %v2551 = vunpack.c.l.b16 %v2413
    %v2552 = vunpack.c.h.b16 %v2413
    %v2553 = vunpack.c.l.b16 %v2414
    %v2554 = vunpack.c.h.b16 %v2414
    %v2555 = vunpack.c.l.b16 %v2415
    %v2556 = vunpack.c.h.b16 %v2415
    %v2557 = vunpack.c.l.b16 %v2416
    %v2558 = vunpack.c.h.b16 %v2416
    %v2559 = vunpack.c.l.b16 %v2417
    %v2560 = vunpack.c.h.b16 %v2417
    %v2561 = vunpack.c.l.b16 %v2418
    %v2562 = vunpack.c.h.b16 %v2418
    %v2563 = vunpack.c.l.b16 %v2419
    %v2564 = vunpack.c.h.b16 %v2419
    %v2565 = vunpack.c.l.b16 %v2420
    %v2566 = vunpack.c.h.b16 %v2420
    %v2567 = vunpack.c.l.b16 %v2421
    %v2568 = vunpack.c.h.b16 %v2421
    %v2569 = vunpack.c.l.b16 %v2422
    %v2570 = vunpack.c.h.b16 %v2422
    %v2571 = vunpack.c.l.b16 %v2423
    %v2572 = vunpack.c.h.b16 %v2423
    %v2573 = vunpack.c.l.b16 %v2424
    %v2574 = vunpack.c.h.b16 %v2424
    %v2575 = vunpack.c.l.b16 %v2425
    %v2576 = vunpack.c.h.b16 %v2425
    %v2577 = vunpack.c.l.b16 %v2426
    %v2578 = vunpack.c.h.b16 %v2426
    %v2579 = vunpack.c.l.b16 %v2427
    %v2580 = vunpack.c.h.b16 %v2427
    %v2581 = vunpack.c.l.b16 %v2428
    %v2582 = vunpack.c.h.b16 %v2428
    %v2583 = vunpack.c.l.b16 %v2429
    %v2584 = vunpack.c.h.b16 %v2429
    %v2585 = vunpack.c.l.b16 %v2430
    %v2586 = vunpack.c.h.b16 %v2430
    %v2587 = vunpack.c.l.b16 %v2431
    %v2588 = vunpack.c.h.b16 %v2431
    %v2589 = vunpack.c.l.b16 %v2432
    %v2590 = vunpack.c.h.b16 %v2432
    %v2591 = vunpack.c.l.b16 %v2433
    %v2592 = vunpack.c.h.b16 %v2433
    %v2593 = vunpack.c.l.b16 %v2434
    %v2594 = vunpack.c.h.b16 %v2434
    %v2595 = vunpack.c.l.b16 %v2435
    %v2596 = vunpack.c.h.b16 %v2435
    %v2597 = vunpack.c.l.b16 %v2436
    %v2598 = vunpack.c.h.b16 %v2436
    %v2599 = vunpack.c.l.b16 %v2437
    %v2600 = vunpack.c.h.b16 %v2437
    %v2601 = vunpack.c.l.b16 %v2438
    %v2602 = vunpack.c.h.b16 %v2438
    %v2603 = vunpack.c.l.b16 %v2439
    %v2604 = vunpack.c.h.b16 %v2439
    %v2605 = vunpack.c.l.b16 %v2440
    %v2606 = vunpack.c.h.b16 %v2440
    %v2607 = vunpack.c.l.b16 %v2441
    %v2608 = vunpack.c.h.b16 %v2441
    %v2609 = vunpack.c.l.b16 %v2442
    %v2610 = vunpack.c.h.b16 %v2442
    %v2611 = vunpack.c.l.b16 %v2443
    %v2612 = vunpack.c.h.b16 %v2443
    %v2613 = vunpack.c.l.b16 %v2444
    %v2614 = vunpack.c.h.b16 %v2444
    %v2615 = vunpack.c.l.b16 %v2445
    %v2616 = vunpack.c.h.b16 %v2445
    %v2617 = vunpack.c.l.b16 %v2446
    %v2618 = vunpack.c.h.b16 %v2446
    %v2619 = vunpack.c.l.b16 %v2447
    %v2620 = vunpack.c.h.b16 %v2447
    %v2621 = vunpack.c.l.b16 %v2448
    %v2622 = vunpack.c.h.b16 %v2448
    %v2623 = vunpack.c.l.b16 %v2449
    %v2624 = vunpack.c.h.b16 %v2449
    %v2625 = vunpack.c.l.b16 %v2450
    %v2626 = vunpack.c.h.b16 %v2450
    %v2627 = vunpack.c.l.b16 %v2451
    %v2628 = vunpack.c.h.b16 %v2451
    %v2629 = vunpack.c.l.b16 %v2452
    %v2630 = vunpack.c.h.b16 %v2452
    %v2631 = vunpack.c.l.b16 %v2453
    %v2632 = vunpack.c.h.b16 %v2453
    %v2633 = vunpack.c.l.b16 %v2454
    %v2634 = vunpack.c.h.b16 %v2454
    %v2635 = vunpack.c.l.b16 %v2455
    %v2636 = vunpack.c.h.b16 %v2455
    %v2637 = vunpack.c.l.b16 %v2456
    %v2638 = vunpack.c.h.b16 %v2456
    %v2639 = vunpack.c.l.b16 %v2457
    %v2640 = vunpack.c.h.b16 %v2457
    %v2641 = vunpack.c.l.b16 %v2458
    %v2642 = vunpack.c.h.b16 %v2458
    %v2643 = vunpack.c.l.b16 %v2459
    %v2644 = vunpack.c.h.b16 %v2459
    %v2645 = vunpack.c.l.b16 %v2460
    %v2646 = vunpack.c.h.b16 %v2460
    %v2647 = vunpack.c.l.b16 %v2461
    %v2648 = vunpack.c.h.b16 %v2461
    %v2649 = vunpack.c.l.b16 %v2462
    %v2650 = vunpack.c.h.b16 %v2462
    %v2651 = vunpack.c.l.b16 %v2463
    %v2652 = vunpack.c.h.b16 %v2463
    %v2653 = vunpack.c.l.b16 %v2464
    %v2654 = vunpack.c.h.b16 %v2464
    %v2655 = vunpack.c.l.b16 %v2465
    %v2656 = vunpack.c.h.b16 %v2465
    %v2657 = vunpack.c.l.b16 %v2466
    %v2658 = vunpack.c.h.b16 %v2466
    %v2659 = vpack.c.b16 %v2531, %v2531
    %v2660 = vpack.c.b16 %v2532, %v2532
    %v2661 = vpack.c.b16 %v2533, %v2533
    %v2662 = vpack.c.b16 %v2534, %v2534
    %v2663 = vpack.c.b16 %v2535, %v2535
    %v2664 = vpack.c.b16 %v2536, %v2536
    %v2665 = vpack.c.b16 %v2537, %v2537
    %v2666 = vpack.c.b16 %v2538, %v2538
    %v2667 = vpack.c.b16 %v2539, %v2539
    %v2668 = vpack.c.b16 %v2540, %v2540
    %v2669 = vpack.c.b16 %v2541, %v2541
    %v2670 = vpack.c.b16 %v2542, %v2542
    %v2671 = vpack.c.b16 %v2543, %v2543
    %v2672 = vpack.c.b16 %v2544, %v2544
    %v2673 = vpack.c.b16 %v2545, %v2545
    %v2674 = vpack.c.b16 %v2546, %v2546
    %v2675 = vpack.c.b16 %v2547, %v2547
    %v2676 = vpack.c.b16 %v2548, %v2548
    %v2677 = vpack.c.b16 %v2549, %v2549
    %v2678 = vpack.c.b16 %v2550, %v2550
    %v2679 = vpack.c.b16 %v2551, %v2551
    %v2680 = vpack.c.b16 %v2552, %v2552
    %v2681 = vpack.c.b16 %v2553, %v2553
    %v2682 = vpack.c.b16 %v2554, %v2554
    %v2683 = vpack.c.b16 %v2555, %v2555
    %v2684 = vpack.c.b16 %v2556, %v2556
    %v2685 = vpack.c.b16 %v2557, %v2557
    %v2686 = vpack.c.b16 %v2558, %v2558
    %v2687 = vpack.c.b16 %v2559, %v2559
    %v2688 = vpack.c.b16 %v2560, %v2560
    %v2689 = vpack.c.b16 %v2561, %v2561
    %v2690 = vpack.c.b16 %v2562, %v2562
    %v2691 = vpack.c.b16 %v2563, %v2563
    %v2692 = vpack.c.b16 %v2564, %v2564
    %v2693 = vpack.c.b16 %v2565, %v2565
    %v2694 = vpack.c.b16 %v2566, %v2566
    %v2695 = vpack.c.b16 %v2567, %v2567
    %v2696 = vpack.c.b16 %v2568, %v2568
    %v2697 = vpack.c.b16 %v2569, %v2569
    %v2698 = vpack.c.b16 %v2570, %v2570
    %v2699 = vpack.c.b16 %v2571, %v2571
    %v2700 = vpack.c.b16 %v2572, %v2572
    %v2701 = vpack.c.b16 %v2573, %v2573
    %v2702 = vpack.c.b16 %v2574, %v2574
    %v2703 = vpack.c.b16 %v2575, %v2575
    %v2704 = vpack.c.b16 %v2576, %v2576
    %v2705 = vpack.c.b16 %v2577, %v2577
    %v2706 = vpack.c.b16 %v2578, %v2578
    %v2707 = vpack.c.b16 %v2579, %v2579
    %v2708 = vpack.c.b16 %v2580, %v2580
    %v2709 = vpack.c.b16 %v2581, %v2581
    %v2710 = vpack.c.b16 %v2582, %v2582
    %v2711 = vpack.c.b16 %v2583, %v2583
    %v2712 = vpack.c.b16 %v2584, %v2584
    %v2713 = vpack.c.b16 %v2585, %v2585
    %v2714 = vpack.c.b16 %v2586, %v2586
    %v2715 = vpack.c.b16 %v2587, %v2587
    %v2716 = vpack.c.b16 %v2588, %v2588
    %v2717 = vpack.c.b16 %v2589, %v2589
    %v2718 = vpack.c.b16 %v2590, %v2590
    %v2719 = vpack.c.b16 %v2591, %v2591
    %v2720 = vpack.c.b16 %v2592, %v2592
    %v2721 = vpack.c.b16 %v2593, %v2593
    %v2722 = vpack.c.b16 %v2594, %v2594
    %v2723 = vpack.c.b16 %v2595, %v2595
    %v2724 = vpack.c.b16 %v2596, %v2596
    %v2725 = vpack.c.b16 %v2597, %v2597
    %v2726 = vpack.c.b16 %v2598, %v2598
    %v2727 = vpack.c.b16 %v2599, %v2599
    %v2728 = vpack.c.b16 %v2600, %v2600
    %v2729 = vpack.c.b16 %v2601, %v2601
    %v2730 = vpack.c.b16 %v2602, %v2602
    %v2731 = vpack.c.b16 %v2603, %v2603
    %v2732 = vpack.c.b16 %v2604, %v2604
    %v2733 = vpack.c.b16 %v2605, %v2605
    %v2734 = vpack.c.b16 %v2606, %v2606
    %v2735 = vpack.c.b16 %v2607, %v2607
    %v2736 = vpack.c.b16 %v2608, %v2608
    %v2737 = vpack.c.b16 %v2609, %v2609
    %v2738 = vpack.c.b16 %v2610, %v2610
    %v2739 = vpack.c.b16 %v2611, %v2611
    %v2740 = vpack.c.b16 %v2612, %v2612
    %v2741 = vpack.c.b16 %v2613, %v2613
    %v2742 = vpack.c.b16 %v2614, %v2614
    %v2743 = vpack.c.b16 %v2615, %v2615
    %v2744 = vpack.c.b16 %v2616, %v2616
    %v2745 = vpack.c.b16 %v2617, %v2617
    %v2746 = vpack.c.b16 %v2618, %v2618
    %v2747 = vpack.c.b16 %v2619, %v2619
    %v2748 = vpack.c.b16 %v2620, %v2620
    %v2749 = vpack.c.b16 %v2621, %v2621
    %v2750 = vpack.c.b16 %v2622, %v2622
    %v2751 = vpack.c.b16 %v2623, %v2623
    %v2752 = vpack.c.b16 %v2624, %v2624
    %v2753 = vpack.c.b16 %v2625, %v2625
    %v2754 = vpack.c.b16 %v2626, %v2626
    %v2755 = vpack.c.b16 %v2627, %v2627
    %v2756 = vpack.c.b16 %v2628, %v2628
    %v2757 = vpack.c.b16 %v2629, %v2629
    %v2758 = vpack.c.b16 %v2630, %v2630
    %v2759 = vpack.c.b16 %v2631, %v2631
    %v2760 = vpack.c.b16 %v2632, %v2632
    %v2761 = vpack.c.b16 %v2633, %v2633
    %v2762 = vpack.c.b16 %v2634, %v2634
    %v2763 = vpack.c.b16 %v2635, %v2635
    %v2764 = vpack.c.b16 %v2636, %v2636
    %v2765 = vpack.c.b16 %v2637, %v2637
    %v2766 = vpack.c.b16 %v2638, %v2638
    %v2767 = vpack.c.b16 %v2639, %v2639
    %v2768 = vpack.c.b16 %v2640, %v2640
    %v2769 = vpack.c.b16 %v2641, %v2641
    %v2770 = vpack.c.b16 %v2642, %v2642
    %v2771 = vpack.c.b16 %v2643, %v2643
    %v2772 = vpack.c.b16 %v2644, %v2644
    %v2773 = vpack.c.b16 %v2645, %v2645
    %v2774 = vpack.c.b16 %v2646, %v2646
    %v2775 = vpack.c.b16 %v2647, %v2647
    %v2776 = vpack.c.b16 %v2648, %v2648
    %v2777 = vpack.c.b16 %v2649, %v2649
    %v2778 = vpack.c.b16 %v2650, %v2650
    %v2779 = vpack.c.b16 %v2651, %v2651
    %v2780 = vpack.c.b16 %v2652, %v2652
    %v2781 = vpack.c.b16 %v2653, %v2653
    %v2782 = vpack.c.b16 %v2654, %v2654
    %v2783 = vpack.c.b16 %v2655, %v2655
    %v2784 = vpack.c.b16 %v2656, %v2656
    %v2785 = vpack.c.b16 %v2657, %v2657
    %v2786 = vpack.c.b16 %v2658, %v2658
    %2915 = vst [vmem:[#allocation8] sm:$0xf] %v2659
    %2916 = vst [vmem:[#allocation8 + $0x4] sm:$0xf] %v2660
    %2917 = vst [vmem:[#allocation8 + $0x8] sm:$0xf] %v2661
    %2918 = vst [vmem:[#allocation8 + $0xc] sm:$0xf] %v2662
    %2919 = vst [vmem:[#allocation8 + $0x10] sm:$0xf] %v2663
    %2920 = vst [vmem:[#allocation8 + $0x14] sm:$0xf] %v2664
    %2921 = vst [vmem:[#allocation8 + $0x18] sm:$0xf] %v2665
    %2922 = vst [vmem:[#allocation8 + $0x1c] sm:$0xf] %v2666
    %2923 = vst [vmem:[#allocation8 + $0x20] sm:$0xf] %v2667
    %2924 = vst [vmem:[#allocation8 + $0x24] sm:$0xf] %v2668
    %2925 = vst [vmem:[#allocation8 + $0x28] sm:$0xf] %v2669
    %2926 = vst [vmem:[#allocation8 + $0x2c] sm:$0xf] %v2670
    %2927 = vst [vmem:[#allocation8 + $0x30] sm:$0xf] %v2671
    %2928 = vst [vmem:[#allocation8 + $0x34] sm:$0xf] %v2672
    %2929 = vst [vmem:[#allocation8 + $0x38] sm:$0xf] %v2673
    %2930 = vst [vmem:[#allocation8 + $0x3c] sm:$0xf] %v2674
    %2931 = vst [vmem:[#allocation8 + $0x40] sm:$0xf] %v2675
    %2932 = vst [vmem:[#allocation8 + $0x44] sm:$0xf] %v2676
    %2933 = vst [vmem:[#allocation8 + $0x48] sm:$0xf] %v2677
    %2934 = vst [vmem:[#allocation8 + $0x4c] sm:$0xf] %v2678
    %2935 = vst [vmem:[#allocation8 + $0x50] sm:$0xf] %v2679
    %2936 = vst [vmem:[#allocation8 + $0x54] sm:$0xf] %v2680
    %2937 = vst [vmem:[#allocation8 + $0x58] sm:$0xf] %v2681
    %2938 = vst [vmem:[#allocation8 + $0x5c] sm:$0xf] %v2682
    %2939 = vst [vmem:[#allocation8 + $0x60] sm:$0xf] %v2683
    %2940 = vst [vmem:[#allocation8 + $0x64] sm:$0xf] %v2684
    %2941 = vst [vmem:[#allocation8 + $0x68] sm:$0xf] %v2685
    %2942 = vst [vmem:[#allocation8 + $0x6c] sm:$0xf] %v2686
    %2943 = vst [vmem:[#allocation8 + $0x70] sm:$0xf] %v2687
    %2944 = vst [vmem:[#allocation8 + $0x74] sm:$0xf] %v2688
    %2945 = vst [vmem:[#allocation8 + $0x78] sm:$0xf] %v2689
    %2946 = vst [vmem:[#allocation8 + $0x7c] sm:$0xf] %v2690
    %2947 = vst [vmem:[#allocation8 + $0x80] sm:$0xf] %v2691
    %2948 = vst [vmem:[#allocation8 + $0x84] sm:$0xf] %v2692
    %2949 = vst [vmem:[#allocation8 + $0x88] sm:$0xf] %v2693
    %2950 = vst [vmem:[#allocation8 + $0x8c] sm:$0xf] %v2694
    %2951 = vst [vmem:[#allocation8 + $0x90] sm:$0xf] %v2695
    %2952 = vst [vmem:[#allocation8 + $0x94] sm:$0xf] %v2696
    %2953 = vst [vmem:[#allocation8 + $0x98] sm:$0xf] %v2697
    %2954 = vst [vmem:[#allocation8 + $0x9c] sm:$0xf] %v2698
    %2955 = vst [vmem:[#allocation8 + $0xa0] sm:$0xf] %v2699
    %2956 = vst [vmem:[#allocation8 + $0xa4] sm:$0xf] %v2700
    %2957 = vst [vmem:[#allocation8 + $0xa8] sm:$0xf] %v2701
    %2958 = vst [vmem:[#allocation8 + $0xac] sm:$0xf] %v2702
    %2959 = vst [vmem:[#allocation8 + $0xb0] sm:$0xf] %v2703
    %2960 = vst [vmem:[#allocation8 + $0xb4] sm:$0xf] %v2704
    %2961 = vst [vmem:[#allocation8 + $0xb8] sm:$0xf] %v2705
    %2962 = vst [vmem:[#allocation8 + $0xbc] sm:$0xf] %v2706
    %2963 = vst [vmem:[#allocation8 + $0xc0] sm:$0xf] %v2707
    %2964 = vst [vmem:[#allocation8 + $0xc4] sm:$0xf] %v2708
    %2965 = vst [vmem:[#allocation8 + $0xc8] sm:$0xf] %v2709
    %2966 = vst [vmem:[#allocation8 + $0xcc] sm:$0xf] %v2710
    %2967 = vst [vmem:[#allocation8 + $0xd0] sm:$0xf] %v2711
    %2968 = vst [vmem:[#allocation8 + $0xd4] sm:$0xf] %v2712
    %2969 = vst [vmem:[#allocation8 + $0xd8] sm:$0xf] %v2713
    %2970 = vst [vmem:[#allocation8 + $0xdc] sm:$0xf] %v2714
    %2971 = vst [vmem:[#allocation8 + $0xe0] sm:$0xf] %v2715
    %2972 = vst [vmem:[#allocation8 + $0xe4] sm:$0xf] %v2716
    %2973 = vst [vmem:[#allocation8 + $0xe8] sm:$0xf] %v2717
    %2974 = vst [vmem:[#allocation8 + $0xec] sm:$0xf] %v2718
    %2975 = vst [vmem:[#allocation8 + $0xf0] sm:$0xf] %v2719
    %2976 = vst [vmem:[#allocation8 + $0xf4] sm:$0xf] %v2720
    %2977 = vst [vmem:[#allocation8 + $0xf8] sm:$0xf] %v2721
    %2978 = vst [vmem:[#allocation8 + $0xfc] sm:$0xf] %v2722
    %2979 = vst [vmem:[#allocation8 + $0x100] sm:$0xf] %v2723
    %2980 = vst [vmem:[#allocation8 + $0x104] sm:$0xf] %v2724
    %2981 = vst [vmem:[#allocation8 + $0x108] sm:$0xf] %v2725
    %2982 = vst [vmem:[#allocation8 + $0x10c] sm:$0xf] %v2726
    %2983 = vst [vmem:[#allocation8 + $0x110] sm:$0xf] %v2727
    %2984 = vst [vmem:[#allocation8 + $0x114] sm:$0xf] %v2728
    %2985 = vst [vmem:[#allocation8 + $0x118] sm:$0xf] %v2729
    %2986 = vst [vmem:[#allocation8 + $0x11c] sm:$0xf] %v2730
    %2987 = vst [vmem:[#allocation8 + $0x120] sm:$0xf] %v2731
    %2988 = vst [vmem:[#allocation8 + $0x124] sm:$0xf] %v2732
    %2989 = vst [vmem:[#allocation8 + $0x128] sm:$0xf] %v2733
    %2990 = vst [vmem:[#allocation8 + $0x12c] sm:$0xf] %v2734
    %2991 = vst [vmem:[#allocation8 + $0x130] sm:$0xf] %v2735
    %2992 = vst [vmem:[#allocation8 + $0x134] sm:$0xf] %v2736
    %2993 = vst [vmem:[#allocation8 + $0x138] sm:$0xf] %v2737
    %2994 = vst [vmem:[#allocation8 + $0x13c] sm:$0xf] %v2738
    %2995 = vst [vmem:[#allocation8 + $0x140] sm:$0xf] %v2739
    %2996 = vst [vmem:[#allocation8 + $0x144] sm:$0xf] %v2740
    %2997 = vst [vmem:[#allocation8 + $0x148] sm:$0xf] %v2741
    %2998 = vst [vmem:[#allocation8 + $0x14c] sm:$0xf] %v2742
    %2999 = vst [vmem:[#allocation8 + $0x150] sm:$0xf] %v2743
    %3000 = vst [vmem:[#allocation8 + $0x154] sm:$0xf] %v2744
    %3001 = vst [vmem:[#allocation8 + $0x158] sm:$0xf] %v2745
    %3002 = vst [vmem:[#allocation8 + $0x15c] sm:$0xf] %v2746
    %3003 = vst [vmem:[#allocation8 + $0x160] sm:$0xf] %v2747
    %3004 = vst [vmem:[#allocation8 + $0x164] sm:$0xf] %v2748
    %3005 = vst [vmem:[#allocation8 + $0x168] sm:$0xf] %v2749
    %3006 = vst [vmem:[#allocation8 + $0x16c] sm:$0xf] %v2750
    %3007 = vst [vmem:[#allocation8 + $0x170] sm:$0xf] %v2751
    %3008 = vst [vmem:[#allocation8 + $0x174] sm:$0xf] %v2752
    %3009 = vst [vmem:[#allocation8 + $0x178] sm:$0xf] %v2753
    %3010 = vst [vmem:[#allocation8 + $0x17c] sm:$0xf] %v2754
    %3011 = vst [vmem:[#allocation8 + $0x180] sm:$0xf] %v2755
    %3012 = vst [vmem:[#allocation8 + $0x184] sm:$0xf] %v2756
    %3013 = vst [vmem:[#allocation8 + $0x188] sm:$0xf] %v2757
    %3014 = vst [vmem:[#allocation8 + $0x18c] sm:$0xf] %v2758
    %3015 = vst [vmem:[#allocation8 + $0x190] sm:$0xf] %v2759
    %3016 = vst [vmem:[#allocation8 + $0x194] sm:$0xf] %v2760
    %3017 = vst [vmem:[#allocation8 + $0x198] sm:$0xf] %v2761
    %3018 = vst [vmem:[#allocation8 + $0x19c] sm:$0xf] %v2762
    %3019 = vst [vmem:[#allocation8 + $0x1a0] sm:$0xf] %v2763
    %3020 = vst [vmem:[#allocation8 + $0x1a4] sm:$0xf] %v2764
    %3021 = vst [vmem:[#allocation8 + $0x1a8] sm:$0xf] %v2765
    %3022 = vst [vmem:[#allocation8 + $0x1ac] sm:$0xf] %v2766
    %3023 = vst [vmem:[#allocation8 + $0x1b0] sm:$0xf] %v2767
    %3024 = vst [vmem:[#allocation8 + $0x1b4] sm:$0xf] %v2768
    %3025 = vst [vmem:[#allocation8 + $0x1b8] sm:$0xf] %v2769
    %3026 = vst [vmem:[#allocation8 + $0x1bc] sm:$0xf] %v2770
    %3027 = vst [vmem:[#allocation8 + $0x1c0] sm:$0xf] %v2771
    %3028 = vst [vmem:[#allocation8 + $0x1c4] sm:$0xf] %v2772
    %3029 = vst [vmem:[#allocation8 + $0x1c8] sm:$0xf] %v2773
    %3030 = vst [vmem:[#allocation8 + $0x1cc] sm:$0xf] %v2774
    %3031 = vst [vmem:[#allocation8 + $0x1d0] sm:$0xf] %v2775
    %3032 = vst [vmem:[#allocation8 + $0x1d4] sm:$0xf] %v2776
    %3033 = vst [vmem:[#allocation8 + $0x1d8] sm:$0xf] %v2777
    %3034 = vst [vmem:[#allocation8 + $0x1dc] sm:$0xf] %v2778
    %3035 = vst [vmem:[#allocation8 + $0x1e0] sm:$0xf] %v2779
    %3036 = vst [vmem:[#allocation8 + $0x1e4] sm:$0xf] %v2780
    %3037 = vst [vmem:[#allocation8 + $0x1e8] sm:$0xf] %v2781
    %3038 = vst [vmem:[#allocation8 + $0x1ec] sm:$0xf] %v2782
    %3039 = vst [vmem:[#allocation8 + $0x1f0] sm:$0xf] %v2783
    %3040 = vst [vmem:[#allocation8 + $0x1f4] sm:$0xf] %v2784
    %3041 = vst [vmem:[#allocation8 + $0x1f8] sm:$0xf] %v2785
    %3042 = vst [vmem:[#allocation8 + $0x1fc] sm:$0xf] %v2786
    // Predicated region
    $region42: #{tpu_custom_call.1} parent=1 // pred_check
      _
    $region43: #{tpu_custom_call.1} parent=1 // pred_check_branch
      %3044 = sbr.rel (0) target = $region45
    $region44: #{tpu_custom_call.1} parent=1 // pred_region
      %s3046 = ssub.s32 8192, 8192
      %3047 = vsyncadd [#allocation4], %s3046
      %s3048 = sshll.u32 [#allocation8], 4
      %s3049 = int_to_ptr.vmem [resolvable:$true] %s3048
      %3054 = dma.vmem_to_hbm [thread:$0]  %s3049, 8192, %s7, [#allocation4], 64, 64, 4
    $region45: #{tpu_custom_call.1} parent=1 // pred_fallthru
      _
    // Predicated region
    $region46: #{tpu_custom_call.1} parent=1 // pred_check
      _
    $region47: #{tpu_custom_call.1} parent=1 // pred_check_branch
      %3056 = sbr.rel (0) target = $region49
    $region48: #{tpu_custom_call.1} parent=1 // pred_region
      %3057 = dma.done [#allocation4], 8192
    $region49: #{tpu_custom_call.1} parent=1 // pred_fallthru
      _
    %3058 = vsyncpa [#allocation3], 1
    %3059 = vsyncpa [#allocation6], 1
    %3060 = vsyncpa [#allocation4], 1

</llo_original>
